<compile_context>
chip_gen: v5e
topology: v5e:2x2
jax: 0.10.0
libtpu: 0.0.40
codegen_flags: <defaults>
</compile_context>

<pallas_src>
import functools

import numpy as np
import jax
import jax.numpy as jnp
from jax import lax
from jax.experimental import pallas as pl
from jax.experimental.pallas import tpu as pltpu


@functools.lru_cache(maxsize=None)
def _bilinear_upsample_matrix_np(size_in: int) -> np.ndarray:
    """(2*size_in, size_in) matrix reproducing torch Upsample(scale_factor=2,
    mode='bilinear', align_corners=False), incl. border clamping.
    Built with numpy so it is a trace-time constant (no per-call XLA ops)."""
    size_out = 2 * size_in
    o = np.arange(size_out)
    src = (o + 0.5) / 2.0 - 0.5
    src = np.maximum(src, 0.0)                      # torch clamps negative src
    i0 = np.minimum(np.floor(src).astype(np.int64), size_in - 1)
    i1 = np.minimum(i0 + 1, size_in - 1)
    l1 = (src - i0).astype(np.float32)
    l0 = np.float32(1.0) - l1
    U = np.zeros((size_out, size_in), np.float32)
    U[o, i0] += l0
    U[o, i1] += l1
    return U


def _make_kernel(N, C_in, C_out, H, W):
    NB = N * C_in
    H2, W2 = 2 * H, 2 * W

    def kernel(x_ref, uwt_ref, uh_ref, wb_ref, o_ref):
        # x_ref  : (N*C_in*H, W)        input, rows ordered (n, c, h)
        # uwt_ref: (W, 2W)              width-upsample matrix (pre-transposed)
        # uh_ref : (2H, H)              height-upsample matrix
        # wb_ref : (N*C_out, N*C_in)    block-diagonal 1x1-conv weight
        # o_ref  : (N*C_out, 2H*2W)     lane-dense output (unmasked vst)

        # 1) width upsample: single 2D MXU matmul, M = N*C_in*H rows.
        xw = jnp.dot(x_ref[...], uwt_ref[...],
                     preferred_element_type=jnp.float32)            # (NB*H, 2W)

        # 2) height upsample: batched matmul over the NB image slices.
        #    (row regrouping only; lane dim unchanged -> no data movement)
        xw3 = xw.reshape(NB, H, W2)
        uhb = jnp.broadcast_to(uh_ref[...], (NB, H2, H))
        up = lax.dot_general(
            uhb, xw3,
            dimension_numbers=(((2,), (1,)), ((0,), (0,))),
            preferred_element_type=jnp.float32)                     # (NB, 2H, 2W)

        # 3) 1x1 conv (pure channel mix) on the lane-dense flat spatial layout.
        up2 = up.reshape(NB, H2 * W2)                               # (NB, 4*H*W)
        out = jnp.dot(wb_ref[...], up2,
                      preferred_element_type=jnp.float32)           # (N*C_out, 4*H*W)
        o_ref[...] = out.astype(o_ref.dtype)

    return kernel


def upsample_pallas(x: jnp.ndarray, conv_w: jnp.ndarray) -> jnp.ndarray:
    """x: (N, C_in, H, W) float32; conv_w: (C_out, C_in, 1, 1).
    Returns (N, C_out, 2H, 2W) == Conv1x1(UpsampleBilinear2x(x)), bias=False."""
    N, C_in, H, W = x.shape
    C_out = conv_w.shape[0]
    H2, W2 = 2 * H, 2 * W
    S4 = H2 * W2
    NB = N * C_in

    # Trace-time numpy constants (~2 KiB each).
    uh = _bilinear_upsample_matrix_np(H)                               # (2H, H)
    uwT = np.ascontiguousarray(_bilinear_upsample_matrix_np(W).T)      # (W, 2W)

    # Tiny block-diagonal conv weight: folds batch into one 2D channel-mix.
    w2d = conv_w.reshape(C_out, C_in).astype(jnp.float32)
    wb = jnp.kron(jnp.eye(N, dtype=jnp.float32), w2d)                  # (N*C_out, N*C_in)

    # Wrapper-side flattening (pure metadata on HBM arrays).
    x_flat = x.reshape(NB * H, W)

    flops = (2 * (NB * H) * W * W2          # width upsample
             + 2 * NB * H2 * H * W2         # height upsample
             + 2 * (N * C_out) * NB * S4)   # 1x1 conv
    bytes_accessed = 4 * (NB * H * W + W * W2 + H2 * H
                          + (N * C_out) * NB + (N * C_out) * S4)

    kernel = _make_kernel(N, C_in, C_out, H, W)

    out_flat = pl.pallas_call(
        kernel,
        out_shape=jax.ShapeDtypeStruct((N * C_out, S4), x.dtype),
        grid=(1,),
        in_specs=[
            pl.BlockSpec((NB * H, W), lambda i: (0, 0)),
            pl.BlockSpec((W, W2), lambda i: (0, 0)),
            pl.BlockSpec((H2, H), lambda i: (0, 0)),
            pl.BlockSpec((N * C_out, NB), lambda i: (0, 0)),
        ],
        out_specs=pl.BlockSpec((N * C_out, S4), lambda i: (0, 0)),
        compiler_params=pltpu.CompilerParams(
            dimension_semantics=("arbitrary",)),
        cost_estimate=pl.CostEstimate(
            flops=flops, transcendentals=0, bytes_accessed=bytes_accessed),
    )(x_flat, jnp.asarray(uwT), jnp.asarray(uh), wb)

    return out_flat.reshape(N, C_out, H2, W2)


def upsample_reference(x: jnp.ndarray, conv_w: jnp.ndarray) -> jnp.ndarray:
    """Pure-JAX reference in the original (torch) op order: upsample then conv."""
    N, C_in, H, W = x.shape
    C_out = conv_w.shape[0]
    uh = jnp.asarray(_bilinear_upsample_matrix_np(H))
    uw = jnp.asarray(_bilinear_upsample_matrix_np(W))
    up = jnp.einsum('Hh,nchw->ncHw', uh, x)
    up = jnp.einsum('Ww,nchw->nchW', uw, up)
    w2d = conv_w.reshape(C_out, C_in)
    return jnp.einsum('oc,nchw->nohw', w2d, up)


if __name__ == "__main__":
    # Module config: UpSample(in_channels=4, s_factor=4)
    in_channels, s_factor = 4, 4
    N, H, W = 2, 16, 16
    C_in = in_channels + s_factor          # conv input channels  (= 8)
    C_out = in_channels                    # conv output channels (= 4)

    key = jax.random.PRNGKey(0)
    kx, kw = jax.random.split(key)
    x = jax.random.normal(kx, (N, C_in, H, W), jnp.float32)
    # nn.Conv2d(in_channels + s_factor, in_channels, 1, bias=False) weight:
    conv_w = jax.random.normal(kw, (C_out, C_in, 1, 1), jnp.float32) * 0.1

    upsample_fn = jax.jit(upsample_pallas)   # constants baked at trace time
    out = jax.block_until_ready(upsample_fn(x, conv_w))
    assert out.shape == (N, C_out, 2 * H, 2 * W), out.shape

    # check 1: matrix-built reference (same op order as torch: upsample -> conv)
    ref = upsample_reference(x, conv_w)
    assert jnp.allclose(out, ref, atol=1e-4, rtol=1e-4), "mismatch vs matrix reference"

    # check 2: independent bilinear implementation (half-pixel centers ==
    # torch align_corners=False), validating the interpolation matrices too.
    up2 = jax.image.resize(x, (N, C_in, 2 * H, 2 * W), method='bilinear')
    ref2 = jnp.einsum('oc,nchw->nohw', conv_w.reshape(C_out, C_in), up2)
    assert jnp.allclose(out, ref2, atol=1e-3, rtol=1e-3), "mismatch vs jax.image.resize"

    print("KERNEL_OK")
</pallas_src>

<mosaic_0001>
module attributes {stable_mosaic.version = 11 : i64} {
  func.func @kernel(%arg0: i32, %arg1: memref<256x16xf32, #tpu.memory_space<vmem>>, %arg2: memref<16x32xf32, #tpu.memory_space<vmem>>, %arg3: memref<32x16xf32, #tpu.memory_space<vmem>>, %arg4: memref<8x16xf32, #tpu.memory_space<vmem>>, %arg5: memref<8x1024xf32, #tpu.memory_space<vmem>>) attributes {dimension_semantics = [#tpu.dimension_semantics<arbitrary>], iteration_bounds = array<i64: 1>, scalar_prefetch = 0 : i64, scratch_operands = 0 : i64, tpu.core_type = #tpu.core_type<tc>, window_params = [{pipeline_mode = #tpu.pipeline_mode<synchronous>, transform_indices = @transform_0, window_bounds = array<i64: 256, 16>}, {pipeline_mode = #tpu.pipeline_mode<synchronous>, transform_indices = @transform_1, window_bounds = array<i64: 16, 32>}, {pipeline_mode = #tpu.pipeline_mode<synchronous>, transform_indices = @transform_2, window_bounds = array<i64: 32, 16>}, {pipeline_mode = #tpu.pipeline_mode<synchronous>, transform_indices = @transform_3, window_bounds = array<i64: 8, 16>}, {pipeline_mode = #tpu.pipeline_mode<synchronous>, transform_indices = @transform_4, window_bounds = array<i64: 8, 1024>}]} {
    %c0 = arith.constant 0 : index
    %c0_0 = arith.constant 0 : index
    %0 = vector.load %arg1[%c0, %c0_0] : memref<256x16xf32, #tpu.memory_space<vmem>>, vector<256x16xf32>
    %c0_1 = arith.constant 0 : index
    %c0_2 = arith.constant 0 : index
    %1 = vector.load %arg2[%c0_1, %c0_2] : memref<16x32xf32, #tpu.memory_space<vmem>>, vector<16x32xf32>
    %cst = arith.constant dense<0.000000e+00> : vector<256x32xf32>
    %2 = tpu.matmul %0, %1, %cst {dimension_numbers = #tpu.dot_dimension_numbers<[1], [0], [0], [1], [0, 0, 1, 1], [], []>} : vector<256x16xf32>, vector<16x32xf32>, vector<256x32xf32> -> vector<256x32xf32>
    %3 = vector.shape_cast %2 : vector<256x32xf32> to vector<16x16x32xf32>
    %c0_3 = arith.constant 0 : index
    %c0_4 = arith.constant 0 : index
    %4 = vector.load %arg3[%c0_3, %c0_4] : memref<32x16xf32, #tpu.memory_space<vmem>>, vector<32x16xf32>
    %5 = vector.shape_cast %4 : vector<32x16xf32> to vector<1x32x16xf32>
    %6 = vector.broadcast %5 : vector<1x32x16xf32> to vector<16x32x16xf32>
    %cst_5 = arith.constant dense<0.000000e+00> : vector<16x32x32xf32>
    %7 = tpu.matmul %6, %3, %cst_5 {dimension_numbers = #tpu.dot_dimension_numbers<[2], [1], [1], [2], [0, 0, 0, 1, 1, 2], [0], [0]>} : vector<16x32x16xf32>, vector<16x16x32xf32>, vector<16x32x32xf32> -> vector<16x32x32xf32>
    %8 = vector.shape_cast %7 : vector<16x32x32xf32> to vector<16x1024xf32>
    %c0_6 = arith.constant 0 : index
    %c0_7 = arith.constant 0 : index
    %9 = vector.load %arg4[%c0_6, %c0_7] : memref<8x16xf32, #tpu.memory_space<vmem>>, vector<8x16xf32>
    %cst_8 = arith.constant dense<0.000000e+00> : vector<8x1024xf32>
    %10 = tpu.matmul %9, %8, %cst_8 {dimension_numbers = #tpu.dot_dimension_numbers<[1], [0], [0], [1], [0, 0, 1, 1], [], []>} : vector<8x16xf32>, vector<16x1024xf32>, vector<8x1024xf32> -> vector<8x1024xf32>
    %c0_9 = arith.constant 0 : index
    %c0_10 = arith.constant 0 : index
    %11 = vector.load %arg5[%c0_9, %c0_10] : memref<8x1024xf32, #tpu.memory_space<vmem>>, vector<8x1024xf32>
    tpu.vector_store %arg5[%c0_9, %c0_10], %10 {strides = array<i32>} : memref<8x1024xf32, #tpu.memory_space<vmem>>, vector<8x1024xf32>,
    return
  }
  func.func @transform_0(%arg0: i32) -> (i32, i32) {
    %c0_i32 = arith.constant 0 : i32
    %c0_i32_0 = arith.constant 0 : i32
    %c0_i32_1 = arith.constant 0 : i32
    return %c0_i32, %c0_i32_0 : i32, i32
  }
  func.func @transform_1(%arg0: i32) -> (i32, i32) {
    %c0_i32 = arith.constant 0 : i32
    %c0_i32_0 = arith.constant 0 : i32
    %c0_i32_1 = arith.constant 0 : i32
    return %c0_i32, %c0_i32_0 : i32, i32
  }
  func.func @transform_2(%arg0: i32) -> (i32, i32) {
    %c0_i32 = arith.constant 0 : i32
    %c0_i32_0 = arith.constant 0 : i32
    %c0_i32_1 = arith.constant 0 : i32
    return %c0_i32, %c0_i32_0 : i32, i32
  }
  func.func @transform_3(%arg0: i32) -> (i32, i32) {
    %c0_i32 = arith.constant 0 : i32
    %c0_i32_0 = arith.constant 0 : i32
    %c0_i32_1 = arith.constant 0 : i32
    return %c0_i32, %c0_i32_0 : i32, i32
  }
  func.func @transform_4(%arg0: i32) -> (i32, i32) {
    %c0_i32 = arith.constant 0 : i32
    %c0_i32_0 = arith.constant 0 : i32
    %c0_i32_1 = arith.constant 0 : i32
    return %c0_i32, %c0_i32_0 : i32, i32
  }
}

</mosaic_0001>

<llo_original>
// kernel: upsample_pallas.1
$region0: #{upsample_pallas.1}
  #allocation0 [shape = 'u32[]', space=smem, size = 0x4, offset = 0x4, fixed_abs, tag = 'smem constant byte address 0x4 - core index']
  #allocation1 [shape = 'u32[72,128]{1,0:T(1,128)}', space=vmem, size = 0x9000, scoped, tag = 'internal scratch']
  %s0 = inlined_call_operand.hbm [shape: f32[256,16], index: 0, kind: input, shape index: {}]
  %s1 = inlined_call_operand.vmem [shape: f32[16,32], index: 1, kind: input, shape index: {}]
  %s2 = inlined_call_operand.vmem [shape: f32[32,16], index: 2, kind: input, shape index: {}]
  %s3 = inlined_call_operand.vmem [shape: f32[8,16], index: 3, kind: input, shape index: {}]
  %s4 = inlined_call_operand.vmem [shape: f32[8,1024], index: 4, kind: output, shape index: {}]
  %s5 = sld [smem:[#allocation0]]
  $region30: #{upsample_pallas.1} parent=0
    _
  %s7 = ssub.s32 1, %s5
  %s8 = scalar_select 0, %s7, %s5
  $region1: #{upsample_pallas.1} parent=0
    #allocation2 [shape = 'u8[131072]{0}', space=vmem, size = 0x20000, scoped, tag = 'input window, operand 0, single buffered']
    #allocation3 [shape = 's32[1]{0}', space=sflag, size = 0x4, scoped, tag = 'scoped memory for upsample_pallas.1']
    %9 = vsyncpa [#allocation3], 0
    // Predicated region
    $region2: #{upsample_pallas.1} parent=1 // pred_check
      _
    $region3: #{upsample_pallas.1} parent=1 // pred_check_branch
      %11 = sbr.rel (0) target = $region5
    $region4: #{upsample_pallas.1} parent=1 // pred_region
      %13 = vsyncadd [#allocation3], 0
      %s14 = sshll.u32 %s0, 4
      %s15 = int_to_ptr.hbm [resolvable:$true] %s14
      %s16 = sshll.u32 [#allocation2], 4
      %s17 = int_to_ptr.vmem [resolvable:$true] %s16
      %22 = dma.hbm_to_vmem [thread:$0]  %s15, 4096, %s17, [#allocation3], 128, 128, 8
    $region5: #{upsample_pallas.1} parent=1 // pred_fallthru
      _
    // Predicated region
    $region6: #{upsample_pallas.1} parent=1 // pred_check
      _
    $region7: #{upsample_pallas.1} parent=1 // pred_check_branch
      %24 = sbr.rel (0) target = $region9
    $region8: #{upsample_pallas.1} parent=1 // pred_region
      _
    $region9: #{upsample_pallas.1} parent=1 // pred_fallthru
      _
    // Predicated region
    $region10: #{upsample_pallas.1} parent=1 // pred_check
      _
    $region11: #{upsample_pallas.1} parent=1 // pred_check_branch
      %26 = sbr.rel (0) target = $region13
    $region12: #{upsample_pallas.1} parent=1 // pred_region
      _
    $region13: #{upsample_pallas.1} parent=1 // pred_fallthru
      _
    // Predicated region
    $region14: #{upsample_pallas.1} parent=1 // pred_check
      _
    $region15: #{upsample_pallas.1} parent=1 // pred_check_branch
      %28 = sbr.rel (0) target = $region17
    $region16: #{upsample_pallas.1} parent=1 // pred_region
      _
    $region17: #{upsample_pallas.1} parent=1 // pred_fallthru
      _
    // Predicated region
    $region18: #{upsample_pallas.1} parent=1 // pred_check
      _
    $region19: #{upsample_pallas.1} parent=1 // pred_check_branch
      %30 = sbr.rel (0) target = $region21
    $region20: #{upsample_pallas.1} parent=1 // pred_region
      %32 = dma.done [#allocation3], 4096
    $region21: #{upsample_pallas.1} parent=1 // pred_fallthru
      _
    %v33 = vld [vmem:[#allocation2] sm:$0xff]
    %v34 = vld [vmem:[#allocation2 + $0x8] sm:$0xff]
    %v35 = vld [vmem:[#allocation2 + $0x10] sm:$0xff]
    %v36 = vld [vmem:[#allocation2 + $0x18] sm:$0xff]
    %v37 = vld [vmem:[#allocation2 + $0x20] sm:$0xff]
    %v38 = vld [vmem:[#allocation2 + $0x28] sm:$0xff]
    %v39 = vld [vmem:[#allocation2 + $0x30] sm:$0xff]
    %v40 = vld [vmem:[#allocation2 + $0x38] sm:$0xff]
    %v41 = vld [vmem:[#allocation2 + $0x40] sm:$0xff]
    %v42 = vld [vmem:[#allocation2 + $0x48] sm:$0xff]
    %v43 = vld [vmem:[#allocation2 + $0x50] sm:$0xff]
    %v44 = vld [vmem:[#allocation2 + $0x58] sm:$0xff]
    %v45 = vld [vmem:[#allocation2 + $0x60] sm:$0xff]
    %v46 = vld [vmem:[#allocation2 + $0x68] sm:$0xff]
    %v47 = vld [vmem:[#allocation2 + $0x70] sm:$0xff]
    %v48 = vld [vmem:[#allocation2 + $0x78] sm:$0xff]
    %v49 = vld [vmem:[#allocation2 + $0x80] sm:$0xff]
    %v50 = vld [vmem:[#allocation2 + $0x88] sm:$0xff]
    %v51 = vld [vmem:[#allocation2 + $0x90] sm:$0xff]
    %v52 = vld [vmem:[#allocation2 + $0x98] sm:$0xff]
    %v53 = vld [vmem:[#allocation2 + $0xa0] sm:$0xff]
    %v54 = vld [vmem:[#allocation2 + $0xa8] sm:$0xff]
    %v55 = vld [vmem:[#allocation2 + $0xb0] sm:$0xff]
    %v56 = vld [vmem:[#allocation2 + $0xb8] sm:$0xff]
    %v57 = vld [vmem:[#allocation2 + $0xc0] sm:$0xff]
    %v58 = vld [vmem:[#allocation2 + $0xc8] sm:$0xff]
    %v59 = vld [vmem:[#allocation2 + $0xd0] sm:$0xff]
    %v60 = vld [vmem:[#allocation2 + $0xd8] sm:$0xff]
    %v61 = vld [vmem:[#allocation2 + $0xe0] sm:$0xff]
    %v62 = vld [vmem:[#allocation2 + $0xe8] sm:$0xff]
    %v63 = vld [vmem:[#allocation2 + $0xf0] sm:$0xff]
    %v64 = vld [vmem:[#allocation2 + $0xf8] sm:$0xff]
    %v65 = vld [vmem:[%s1] sm:$0xff]
    %v66 = vld [vmem:[%s1 + $0x8] sm:$0xff]
    %vm67 = vcmask 130048
    %v69 = vsel %vm67, %v33, 0
    %v72 = vsel %vm67, %v34, 0
    %v75 = vsel %vm67, %v35, 0
    %v78 = vsel %vm67, %v36, 0
    %v81 = vsel %vm67, %v37, 0
    %v84 = vsel %vm67, %v38, 0
    %v87 = vsel %vm67, %v39, 0
    %v90 = vsel %vm67, %v40, 0
    %v93 = vsel %vm67, %v41, 0
    %v96 = vsel %vm67, %v42, 0
    %v99 = vsel %vm67, %v43, 0
    %v102 = vsel %vm67, %v44, 0
    %v105 = vsel %vm67, %v45, 0
    %v108 = vsel %vm67, %v46, 0
    %v111 = vsel %vm67, %v47, 0
    %v114 = vsel %vm67, %v48, 0
    %v117 = vsel %vm67, %v49, 0
    %v120 = vsel %vm67, %v50, 0
    %v123 = vsel %vm67, %v51, 0
    %v126 = vsel %vm67, %v52, 0
    %v129 = vsel %vm67, %v53, 0
    %v132 = vsel %vm67, %v54, 0
    %v135 = vsel %vm67, %v55, 0
    %v138 = vsel %vm67, %v56, 0
    %v141 = vsel %vm67, %v57, 0
    %v144 = vsel %vm67, %v58, 0
    %v147 = vsel %vm67, %v59, 0
    %v150 = vsel %vm67, %v60, 0
    %v153 = vsel %vm67, %v61, 0
    %v156 = vsel %vm67, %v62, 0
    %v159 = vsel %vm67, %v63, 0
    %v162 = vsel %vm67, %v64, 0
    %164 = vmatpush.msra.mxu0 0.0
    %165 = vmatpush.msra.mxu0 0.0
    %166 = vmatpush.msra.mxu0 0.0
    %167 = vmatpush.msra.mxu0 0.0
    %168 = vmatpush.msra.mxu0 0.0
    %169 = vmatpush.msra.mxu0 0.0
    %170 = vmatpush.msra.mxu0 0.0
    %171 = vmatpush.msra.mxu0 0.0
    %172 = vmatpush.msra.mxu0 0.0
    %173 = vmatpush.msra.mxu0 0.0
    %174 = vmatpush.msra.mxu0 0.0
    %175 = vmatpush.msra.mxu0 0.0
    %176 = vmatpush.msra.mxu0 0.0
    %177 = vmatpush.msra.mxu0 0.0
    %178 = vmatpush.msra.mxu0 %v66
    %179 = vmatpush.msra.mxu0 %v65
    %180 = vmatmul.f32.gmra.mxu0 %v69
    %v181 = vpop.f32.mrf.mxu0
    %v182 = vadd.f32 0.0, %v181
    %183 = vmatmul.f32.gmra.mxu0 %v72
    %v184 = vpop.f32.mrf.mxu0
    %v185 = vadd.f32 0.0, %v184
    %186 = vmatmul.f32.gmra.mxu0 %v75
    %v187 = vpop.f32.mrf.mxu0
    %v188 = vadd.f32 0.0, %v187
    %189 = vmatmul.f32.gmra.mxu0 %v78
    %v190 = vpop.f32.mrf.mxu0
    %v191 = vadd.f32 0.0, %v190
    %192 = vmatmul.f32.gmra.mxu0 %v81
    %v193 = vpop.f32.mrf.mxu0
    %v194 = vadd.f32 0.0, %v193
    %195 = vmatmul.f32.gmra.mxu0 %v84
    %v196 = vpop.f32.mrf.mxu0
    %v197 = vadd.f32 0.0, %v196
    %198 = vmatmul.f32.gmra.mxu0 %v87
    %v199 = vpop.f32.mrf.mxu0
    %v200 = vadd.f32 0.0, %v199
    %201 = vmatmul.f32.gmra.mxu0 %v90
    %v202 = vpop.f32.mrf.mxu0
    %v203 = vadd.f32 0.0, %v202
    %204 = vmatmul.f32.gmra.mxu0 %v93
    %v205 = vpop.f32.mrf.mxu0
    %v206 = vadd.f32 0.0, %v205
    %207 = vmatmul.f32.gmra.mxu0 %v96
    %v208 = vpop.f32.mrf.mxu0
    %v209 = vadd.f32 0.0, %v208
    %210 = vmatmul.f32.gmra.mxu0 %v99
    %v211 = vpop.f32.mrf.mxu0
    %v212 = vadd.f32 0.0, %v211
    %213 = vmatmul.f32.gmra.mxu0 %v102
    %v214 = vpop.f32.mrf.mxu0
    %v215 = vadd.f32 0.0, %v214
    %216 = vmatmul.f32.gmra.mxu0 %v105
    %v217 = vpop.f32.mrf.mxu0
    %v218 = vadd.f32 0.0, %v217
    %219 = vmatmul.f32.gmra.mxu0 %v108
    %v220 = vpop.f32.mrf.mxu0
    %v221 = vadd.f32 0.0, %v220
    %222 = vmatmul.f32.gmra.mxu0 %v111
    %v223 = vpop.f32.mrf.mxu0
    %v224 = vadd.f32 0.0, %v223
    %225 = vmatmul.f32.gmra.mxu0 %v114
    %v226 = vpop.f32.mrf.mxu0
    %v227 = vadd.f32 0.0, %v226
    %228 = vmatmul.f32.gmra.mxu0 %v117
    %v229 = vpop.f32.mrf.mxu0
    %v230 = vadd.f32 0.0, %v229
    %231 = vmatmul.f32.gmra.mxu0 %v120
    %v232 = vpop.f32.mrf.mxu0
    %v233 = vadd.f32 0.0, %v232
    %234 = vmatmul.f32.gmra.mxu0 %v123
    %v235 = vpop.f32.mrf.mxu0
    %v236 = vadd.f32 0.0, %v235
    %237 = vmatmul.f32.gmra.mxu0 %v126
    %v238 = vpop.f32.mrf.mxu0
    %v239 = vadd.f32 0.0, %v238
    %240 = vmatmul.f32.gmra.mxu0 %v129
    %v241 = vpop.f32.mrf.mxu0
    %v242 = vadd.f32 0.0, %v241
    %243 = vmatmul.f32.gmra.mxu0 %v132
    %v244 = vpop.f32.mrf.mxu0
    %v245 = vadd.f32 0.0, %v244
    %246 = vmatmul.f32.gmra.mxu0 %v135
    %v247 = vpop.f32.mrf.mxu0
    %v248 = vadd.f32 0.0, %v247
    %249 = vmatmul.f32.gmra.mxu0 %v138
    %v250 = vpop.f32.mrf.mxu0
    %v251 = vadd.f32 0.0, %v250
    %252 = vmatmul.f32.gmra.mxu0 %v141
    %v253 = vpop.f32.mrf.mxu0
    %v254 = vadd.f32 0.0, %v253
    %255 = vmatmul.f32.gmra.mxu0 %v144
    %v256 = vpop.f32.mrf.mxu0
    %v257 = vadd.f32 0.0, %v256
    %258 = vmatmul.f32.gmra.mxu0 %v147
    %v259 = vpop.f32.mrf.mxu0
    %v260 = vadd.f32 0.0, %v259
    %261 = vmatmul.f32.gmra.mxu0 %v150
    %v262 = vpop.f32.mrf.mxu0
    %v263 = vadd.f32 0.0, %v262
    %264 = vmatmul.f32.gmra.mxu0 %v153
    %v265 = vpop.f32.mrf.mxu0
    %v266 = vadd.f32 0.0, %v265
    %267 = vmatmul.f32.gmra.mxu0 %v156
    %v268 = vpop.f32.mrf.mxu0
    %v269 = vadd.f32 0.0, %v268
    %270 = vmatmul.f32.gmra.mxu0 %v159
    %v271 = vpop.f32.mrf.mxu0
    %v272 = vadd.f32 0.0, %v271
    %273 = vmatmul.f32.gmra.mxu0 %v162
    %v274 = vpop.f32.mrf.mxu0
    %v275 = vadd.f32 0.0, %v274
    %276 = vdwg.mxu0
    %v277 = vld [vmem:[%s2] sm:$0xff]
    %v278 = vld [vmem:[%s2 + $0x8] sm:$0xff]
    %v279 = vld [vmem:[%s2 + $0x10] sm:$0xff]
    %v280 = vld [vmem:[%s2 + $0x18] sm:$0xff]
    %v282 = vsel %vm67, %v277, 0
    %v285 = vsel %vm67, %v278, 0
    %v288 = vsel %vm67, %v279, 0
    %v291 = vsel %vm67, %v280, 0
    %293 = vmatpush.msra.mxu0 0.0
    %294 = vmatpush.msra.mxu0 0.0
    %295 = vmatpush.msra.mxu0 0.0
    %296 = vmatpush.msra.mxu0 0.0
    %297 = vmatpush.msra.mxu0 0.0
    %298 = vmatpush.msra.mxu0 0.0
    %299 = vmatpush.msra.mxu0 0.0
    %300 = vmatpush.msra.mxu0 0.0
    %301 = vmatpush.msra.mxu0 0.0
    %302 = vmatpush.msra.mxu0 0.0
    %303 = vmatpush.msra.mxu0 0.0
    %304 = vmatpush.msra.mxu0 0.0
    %305 = vmatpush.msra.mxu0 0.0
    %306 = vmatpush.msra.mxu0 0.0
    %307 = vmatpush.msra.mxu0 %v185
    %308 = vmatpush.msra.mxu0 %v182
    %309 = vmatmul.f32.gmra.mxu0 %v282
    %v310 = vpop.f32.mrf.mxu0
    %v311 = vadd.f32 0.0, %v310
    %312 = vmatmul.f32.gmra.mxu0 %v285
    %v313 = vpop.f32.mrf.mxu0
    %v314 = vadd.f32 0.0, %v313
    %315 = vmatmul.f32.gmra.mxu0 %v288
    %v316 = vpop.f32.mrf.mxu0
    %v317 = vadd.f32 0.0, %v316
    %318 = vmatmul.f32.gmra.mxu0 %v291
    %v319 = vpop.f32.mrf.mxu0
    %v320 = vadd.f32 0.0, %v319
    %321 = vdwg.mxu0
    %322 = vmatpush.msra.mxu0 0.0
    %323 = vmatpush.msra.mxu0 0.0
    %324 = vmatpush.msra.mxu0 0.0
    %325 = vmatpush.msra.mxu0 0.0
    %326 = vmatpush.msra.mxu0 0.0
    %327 = vmatpush.msra.mxu0 0.0
    %328 = vmatpush.msra.mxu0 0.0
    %329 = vmatpush.msra.mxu0 0.0
    %330 = vmatpush.msra.mxu0 0.0
    %331 = vmatpush.msra.mxu0 0.0
    %332 = vmatpush.msra.mxu0 0.0
    %333 = vmatpush.msra.mxu0 0.0
    %334 = vmatpush.msra.mxu0 0.0
    %335 = vmatpush.msra.mxu0 0.0
    %336 = vmatpush.msra.mxu0 %v191
    %337 = vmatpush.msra.mxu0 %v188
    %338 = vmatmul.f32.gmra.mxu0 %v282
    %v339 = vpop.f32.mrf.mxu0
    %v340 = vadd.f32 0.0, %v339
    %341 = vmatmul.f32.gmra.mxu0 %v285
    %v342 = vpop.f32.mrf.mxu0
    %v343 = vadd.f32 0.0, %v342
    %344 = vmatmul.f32.gmra.mxu0 %v288
    %v345 = vpop.f32.mrf.mxu0
    %v346 = vadd.f32 0.0, %v345
    %347 = vmatmul.f32.gmra.mxu0 %v291
    %v348 = vpop.f32.mrf.mxu0
    %v349 = vadd.f32 0.0, %v348
    %350 = vdwg.mxu0
    %351 = vmatpush.msra.mxu0 0.0
    %352 = vmatpush.msra.mxu0 0.0
    %353 = vmatpush.msra.mxu0 0.0
    %354 = vmatpush.msra.mxu0 0.0
    %355 = vmatpush.msra.mxu0 0.0
    %356 = vmatpush.msra.mxu0 0.0
    %357 = vmatpush.msra.mxu0 0.0
    %358 = vmatpush.msra.mxu0 0.0
    %359 = vmatpush.msra.mxu0 0.0
    %360 = vmatpush.msra.mxu0 0.0
    %361 = vmatpush.msra.mxu0 0.0
    %362 = vmatpush.msra.mxu0 0.0
    %363 = vmatpush.msra.mxu0 0.0
    %364 = vmatpush.msra.mxu0 0.0
    %365 = vmatpush.msra.mxu0 %v197
    %366 = vmatpush.msra.mxu0 %v194
    %367 = vmatmul.f32.gmra.mxu0 %v282
    %v368 = vpop.f32.mrf.mxu0
    %v369 = vadd.f32 0.0, %v368
    %370 = vmatmul.f32.gmra.mxu0 %v285
    %v371 = vpop.f32.mrf.mxu0
    %v372 = vadd.f32 0.0, %v371
    %373 = vmatmul.f32.gmra.mxu0 %v288
    %v374 = vpop.f32.mrf.mxu0
    %v375 = vadd.f32 0.0, %v374
    %376 = vmatmul.f32.gmra.mxu0 %v291
    %v377 = vpop.f32.mrf.mxu0
    %v378 = vadd.f32 0.0, %v377
    %379 = vdwg.mxu0
    %380 = vmatpush.msra.mxu0 0.0
    %381 = vmatpush.msra.mxu0 0.0
    %382 = vmatpush.msra.mxu0 0.0
    %383 = vmatpush.msra.mxu0 0.0
    %384 = vmatpush.msra.mxu0 0.0
    %385 = vmatpush.msra.mxu0 0.0
    %386 = vmatpush.msra.mxu0 0.0
    %387 = vmatpush.msra.mxu0 0.0
    %388 = vmatpush.msra.mxu0 0.0
    %389 = vmatpush.msra.mxu0 0.0
    %390 = vmatpush.msra.mxu0 0.0
    %391 = vmatpush.msra.mxu0 0.0
    %392 = vmatpush.msra.mxu0 0.0
    %393 = vmatpush.msra.mxu0 0.0
    %394 = vmatpush.msra.mxu0 %v203
    %395 = vmatpush.msra.mxu0 %v200
    %396 = vmatmul.f32.gmra.mxu0 %v282
    %v397 = vpop.f32.mrf.mxu0
    %v398 = vadd.f32 0.0, %v397
    %399 = vmatmul.f32.gmra.mxu0 %v285
    %v400 = vpop.f32.mrf.mxu0
    %v401 = vadd.f32 0.0, %v400
    %402 = vmatmul.f32.gmra.mxu0 %v288
    %v403 = vpop.f32.mrf.mxu0
    %v404 = vadd.f32 0.0, %v403
    %405 = vmatmul.f32.gmra.mxu0 %v291
    %v406 = vpop.f32.mrf.mxu0
    %v407 = vadd.f32 0.0, %v406
    %408 = vdwg.mxu0
    %409 = vmatpush.msra.mxu0 0.0
    %410 = vmatpush.msra.mxu0 0.0
    %411 = vmatpush.msra.mxu0 0.0
    %412 = vmatpush.msra.mxu0 0.0
    %413 = vmatpush.msra.mxu0 0.0
    %414 = vmatpush.msra.mxu0 0.0
    %415 = vmatpush.msra.mxu0 0.0
    %416 = vmatpush.msra.mxu0 0.0
    %417 = vmatpush.msra.mxu0 0.0
    %418 = vmatpush.msra.mxu0 0.0
    %419 = vmatpush.msra.mxu0 0.0
    %420 = vmatpush.msra.mxu0 0.0
    %421 = vmatpush.msra.mxu0 0.0
    %422 = vmatpush.msra.mxu0 0.0
    %423 = vmatpush.msra.mxu0 %v209
    %424 = vmatpush.msra.mxu0 %v206
    %425 = vmatmul.f32.gmra.mxu0 %v282
    %v426 = vpop.f32.mrf.mxu0
    %v427 = vadd.f32 0.0, %v426
    %428 = vmatmul.f32.gmra.mxu0 %v285
    %v429 = vpop.f32.mrf.mxu0
    %v430 = vadd.f32 0.0, %v429
    %431 = vmatmul.f32.gmra.mxu0 %v288
    %v432 = vpop.f32.mrf.mxu0
    %v433 = vadd.f32 0.0, %v432
    %434 = vmatmul.f32.gmra.mxu0 %v291
    %v435 = vpop.f32.mrf.mxu0
    %v436 = vadd.f32 0.0, %v435
    %437 = vdwg.mxu0
    %438 = vmatpush.msra.mxu0 0.0
    %439 = vmatpush.msra.mxu0 0.0
    %440 = vmatpush.msra.mxu0 0.0
    %441 = vmatpush.msra.mxu0 0.0
    %442 = vmatpush.msra.mxu0 0.0
    %443 = vmatpush.msra.mxu0 0.0
    %444 = vmatpush.msra.mxu0 0.0
    %445 = vmatpush.msra.mxu0 0.0
    %446 = vmatpush.msra.mxu0 0.0
    %447 = vmatpush.msra.mxu0 0.0
    %448 = vmatpush.msra.mxu0 0.0
    %449 = vmatpush.msra.mxu0 0.0
    %450 = vmatpush.msra.mxu0 0.0
    %451 = vmatpush.msra.mxu0 0.0
    %452 = vmatpush.msra.mxu0 %v215
    %453 = vmatpush.msra.mxu0 %v212
    %454 = vmatmul.f32.gmra.mxu0 %v282
    %v455 = vpop.f32.mrf.mxu0
    %v456 = vadd.f32 0.0, %v455
    %457 = vmatmul.f32.gmra.mxu0 %v285
    %v458 = vpop.f32.mrf.mxu0
    %v459 = vadd.f32 0.0, %v458
    %460 = vmatmul.f32.gmra.mxu0 %v288
    %v461 = vpop.f32.mrf.mxu0
    %v462 = vadd.f32 0.0, %v461
    %463 = vmatmul.f32.gmra.mxu0 %v291
    %v464 = vpop.f32.mrf.mxu0
    %v465 = vadd.f32 0.0, %v464
    %466 = vdwg.mxu0
    %467 = vmatpush.msra.mxu0 0.0
    %468 = vmatpush.msra.mxu0 0.0
    %469 = vmatpush.msra.mxu0 0.0
    %470 = vmatpush.msra.mxu0 0.0
    %471 = vmatpush.msra.mxu0 0.0
    %472 = vmatpush.msra.mxu0 0.0
    %473 = vmatpush.msra.mxu0 0.0
    %474 = vmatpush.msra.mxu0 0.0
    %475 = vmatpush.msra.mxu0 0.0
    %476 = vmatpush.msra.mxu0 0.0
    %477 = vmatpush.msra.mxu0 0.0
    %478 = vmatpush.msra.mxu0 0.0
    %479 = vmatpush.msra.mxu0 0.0
    %480 = vmatpush.msra.mxu0 0.0
    %481 = vmatpush.msra.mxu0 %v221
    %482 = vmatpush.msra.mxu0 %v218
    %483 = vmatmul.f32.gmra.mxu0 %v282
    %v484 = vpop.f32.mrf.mxu0
    %v485 = vadd.f32 0.0, %v484
    %486 = vmatmul.f32.gmra.mxu0 %v285
    %v487 = vpop.f32.mrf.mxu0
    %v488 = vadd.f32 0.0, %v487
    %489 = vmatmul.f32.gmra.mxu0 %v288
    %v490 = vpop.f32.mrf.mxu0
    %v491 = vadd.f32 0.0, %v490
    %492 = vmatmul.f32.gmra.mxu0 %v291
    %v493 = vpop.f32.mrf.mxu0
    %v494 = vadd.f32 0.0, %v493
    %495 = vdwg.mxu0
    %496 = vmatpush.msra.mxu0 0.0
    %497 = vmatpush.msra.mxu0 0.0
    %498 = vmatpush.msra.mxu0 0.0
    %499 = vmatpush.msra.mxu0 0.0
    %500 = vmatpush.msra.mxu0 0.0
    %501 = vmatpush.msra.mxu0 0.0
    %502 = vmatpush.msra.mxu0 0.0
    %503 = vmatpush.msra.mxu0 0.0
    %504 = vmatpush.msra.mxu0 0.0
    %505 = vmatpush.msra.mxu0 0.0
    %506 = vmatpush.msra.mxu0 0.0
    %507 = vmatpush.msra.mxu0 0.0
    %508 = vmatpush.msra.mxu0 0.0
    %509 = vmatpush.msra.mxu0 0.0
    %510 = vmatpush.msra.mxu0 %v227
    %511 = vmatpush.msra.mxu0 %v224
    %512 = vmatmul.f32.gmra.mxu0 %v282
    %v513 = vpop.f32.mrf.mxu0
    %v514 = vadd.f32 0.0, %v513
    %515 = vmatmul.f32.gmra.mxu0 %v285
    %v516 = vpop.f32.mrf.mxu0
    %v517 = vadd.f32 0.0, %v516
    %518 = vmatmul.f32.gmra.mxu0 %v288
    %v519 = vpop.f32.mrf.mxu0
    %v520 = vadd.f32 0.0, %v519
    %521 = vmatmul.f32.gmra.mxu0 %v291
    %v522 = vpop.f32.mrf.mxu0
    %v523 = vadd.f32 0.0, %v522
    %524 = vdwg.mxu0
    %525 = vmatpush.msra.mxu0 0.0
    %526 = vmatpush.msra.mxu0 0.0
    %527 = vmatpush.msra.mxu0 0.0
    %528 = vmatpush.msra.mxu0 0.0
    %529 = vmatpush.msra.mxu0 0.0
    %530 = vmatpush.msra.mxu0 0.0
    %531 = vmatpush.msra.mxu0 0.0
    %532 = vmatpush.msra.mxu0 0.0
    %533 = vmatpush.msra.mxu0 0.0
    %534 = vmatpush.msra.mxu0 0.0
    %535 = vmatpush.msra.mxu0 0.0
    %536 = vmatpush.msra.mxu0 0.0
    %537 = vmatpush.msra.mxu0 0.0
    %538 = vmatpush.msra.mxu0 0.0
    %539 = vmatpush.msra.mxu0 %v233
    %540 = vmatpush.msra.mxu0 %v230
    %541 = vmatmul.f32.gmra.mxu0 %v282
    %v542 = vpop.f32.mrf.mxu0
    %v543 = vadd.f32 0.0, %v542
    %544 = vmatmul.f32.gmra.mxu0 %v285
    %v545 = vpop.f32.mrf.mxu0
    %v546 = vadd.f32 0.0, %v545
    %547 = vmatmul.f32.gmra.mxu0 %v288
    %v548 = vpop.f32.mrf.mxu0
    %v549 = vadd.f32 0.0, %v548
    %550 = vmatmul.f32.gmra.mxu0 %v291
    %v551 = vpop.f32.mrf.mxu0
    %v552 = vadd.f32 0.0, %v551
    %553 = vdwg.mxu0
    %554 = vmatpush.msra.mxu0 0.0
    %555 = vmatpush.msra.mxu0 0.0
    %556 = vmatpush.msra.mxu0 0.0
    %557 = vmatpush.msra.mxu0 0.0
    %558 = vmatpush.msra.mxu0 0.0
    %559 = vmatpush.msra.mxu0 0.0
    %560 = vmatpush.msra.mxu0 0.0
    %561 = vmatpush.msra.mxu0 0.0
    %562 = vmatpush.msra.mxu0 0.0
    %563 = vmatpush.msra.mxu0 0.0
    %564 = vmatpush.msra.mxu0 0.0
    %565 = vmatpush.msra.mxu0 0.0
    %566 = vmatpush.msra.mxu0 0.0
    %567 = vmatpush.msra.mxu0 0.0
    %568 = vmatpush.msra.mxu0 %v239
    %569 = vmatpush.msra.mxu0 %v236
    %570 = vmatmul.f32.gmra.mxu0 %v282
    %v571 = vpop.f32.mrf.mxu0
    %v572 = vadd.f32 0.0, %v571
    %573 = vmatmul.f32.gmra.mxu0 %v285
    %v574 = vpop.f32.mrf.mxu0
    %v575 = vadd.f32 0.0, %v574
    %576 = vmatmul.f32.gmra.mxu0 %v288
    %v577 = vpop.f32.mrf.mxu0
    %v578 = vadd.f32 0.0, %v577
    %579 = vmatmul.f32.gmra.mxu0 %v291
    %v580 = vpop.f32.mrf.mxu0
    %v581 = vadd.f32 0.0, %v580
    %582 = vdwg.mxu0
    %583 = vmatpush.msra.mxu0 0.0
    %584 = vmatpush.msra.mxu0 0.0
    %585 = vmatpush.msra.mxu0 0.0
    %586 = vmatpush.msra.mxu0 0.0
    %587 = vmatpush.msra.mxu0 0.0
    %588 = vmatpush.msra.mxu0 0.0
    %589 = vmatpush.msra.mxu0 0.0
    %590 = vmatpush.msra.mxu0 0.0
    %591 = vmatpush.msra.mxu0 0.0
    %592 = vmatpush.msra.mxu0 0.0
    %593 = vmatpush.msra.mxu0 0.0
    %594 = vmatpush.msra.mxu0 0.0
    %595 = vmatpush.msra.mxu0 0.0
    %596 = vmatpush.msra.mxu0 0.0
    %597 = vmatpush.msra.mxu0 %v245
    %598 = vmatpush.msra.mxu0 %v242
    %599 = vmatmul.f32.gmra.mxu0 %v282
    %v600 = vpop.f32.mrf.mxu0
    %v601 = vadd.f32 0.0, %v600
    %602 = vmatmul.f32.gmra.mxu0 %v285
    %v603 = vpop.f32.mrf.mxu0
    %v604 = vadd.f32 0.0, %v603
    %605 = vmatmul.f32.gmra.mxu0 %v288
    %v606 = vpop.f32.mrf.mxu0
    %v607 = vadd.f32 0.0, %v606
    %608 = vmatmul.f32.gmra.mxu0 %v291
    %v609 = vpop.f32.mrf.mxu0
    %v610 = vadd.f32 0.0, %v609
    %611 = vdwg.mxu0
    %612 = vmatpush.msra.mxu0 0.0
    %613 = vmatpush.msra.mxu0 0.0
    %614 = vmatpush.msra.mxu0 0.0
    %615 = vmatpush.msra.mxu0 0.0
    %616 = vmatpush.msra.mxu0 0.0
    %617 = vmatpush.msra.mxu0 0.0
    %618 = vmatpush.msra.mxu0 0.0
    %619 = vmatpush.msra.mxu0 0.0
    %620 = vmatpush.msra.mxu0 0.0
    %621 = vmatpush.msra.mxu0 0.0
    %622 = vmatpush.msra.mxu0 0.0
    %623 = vmatpush.msra.mxu0 0.0
    %624 = vmatpush.msra.mxu0 0.0
    %625 = vmatpush.msra.mxu0 0.0
    %626 = vmatpush.msra.mxu0 %v251
    %627 = vmatpush.msra.mxu0 %v248
    %628 = vmatmul.f32.gmra.mxu0 %v282
    %v629 = vpop.f32.mrf.mxu0
    %v630 = vadd.f32 0.0, %v629
    %631 = vmatmul.f32.gmra.mxu0 %v285
    %v632 = vpop.f32.mrf.mxu0
    %v633 = vadd.f32 0.0, %v632
    %634 = vmatmul.f32.gmra.mxu0 %v288
    %v635 = vpop.f32.mrf.mxu0
    %v636 = vadd.f32 0.0, %v635
    %637 = vmatmul.f32.gmra.mxu0 %v291
    %v638 = vpop.f32.mrf.mxu0
    %v639 = vadd.f32 0.0, %v638
    %640 = vdwg.mxu0
    %641 = vmatpush.msra.mxu0 0.0
    %642 = vmatpush.msra.mxu0 0.0
    %643 = vmatpush.msra.mxu0 0.0
    %644 = vmatpush.msra.mxu0 0.0
    %645 = vmatpush.msra.mxu0 0.0
    %646 = vmatpush.msra.mxu0 0.0
    %647 = vmatpush.msra.mxu0 0.0
    %648 = vmatpush.msra.mxu0 0.0
    %649 = vmatpush.msra.mxu0 0.0
    %650 = vmatpush.msra.mxu0 0.0
    %651 = vmatpush.msra.mxu0 0.0
    %652 = vmatpush.msra.mxu0 0.0
    %653 = vmatpush.msra.mxu0 0.0
    %654 = vmatpush.msra.mxu0 0.0
    %655 = vmatpush.msra.mxu0 %v257
    %656 = vmatpush.msra.mxu0 %v254
    %657 = vmatmul.f32.gmra.mxu0 %v282
    %v658 = vpop.f32.mrf.mxu0
    %v659 = vadd.f32 0.0, %v658
    %660 = vmatmul.f32.gmra.mxu0 %v285
    %v661 = vpop.f32.mrf.mxu0
    %v662 = vadd.f32 0.0, %v661
    %663 = vmatmul.f32.gmra.mxu0 %v288
    %v664 = vpop.f32.mrf.mxu0
    %v665 = vadd.f32 0.0, %v664
    %666 = vmatmul.f32.gmra.mxu0 %v291
    %v667 = vpop.f32.mrf.mxu0
    %v668 = vadd.f32 0.0, %v667
    %669 = vdwg.mxu0
    %670 = vmatpush.msra.mxu0 0.0
    %671 = vmatpush.msra.mxu0 0.0
    %672 = vmatpush.msra.mxu0 0.0
    %673 = vmatpush.msra.mxu0 0.0
    %674 = vmatpush.msra.mxu0 0.0
    %675 = vmatpush.msra.mxu0 0.0
    %676 = vmatpush.msra.mxu0 0.0
    %677 = vmatpush.msra.mxu0 0.0
    %678 = vmatpush.msra.mxu0 0.0
    %679 = vmatpush.msra.mxu0 0.0
    %680 = vmatpush.msra.mxu0 0.0
    %681 = vmatpush.msra.mxu0 0.0
    %682 = vmatpush.msra.mxu0 0.0
    %683 = vmatpush.msra.mxu0 0.0
    %684 = vmatpush.msra.mxu0 %v263
    %685 = vmatpush.msra.mxu0 %v260
    %686 = vmatmul.f32.gmra.mxu0 %v282
    %v687 = vpop.f32.mrf.mxu0
    %v688 = vadd.f32 0.0, %v687
    %689 = vmatmul.f32.gmra.mxu0 %v285
    %v690 = vpop.f32.mrf.mxu0
    %v691 = vadd.f32 0.0, %v690
    %692 = vmatmul.f32.gmra.mxu0 %v288
    %v693 = vpop.f32.mrf.mxu0
    %v694 = vadd.f32 0.0, %v693
    %695 = vmatmul.f32.gmra.mxu0 %v291
    %v696 = vpop.f32.mrf.mxu0
    %v697 = vadd.f32 0.0, %v696
    %698 = vdwg.mxu0
    %699 = vmatpush.msra.mxu0 0.0
    %700 = vmatpush.msra.mxu0 0.0
    %701 = vmatpush.msra.mxu0 0.0
    %702 = vmatpush.msra.mxu0 0.0
    %703 = vmatpush.msra.mxu0 0.0
    %704 = vmatpush.msra.mxu0 0.0
    %705 = vmatpush.msra.mxu0 0.0
    %706 = vmatpush.msra.mxu0 0.0
    %707 = vmatpush.msra.mxu0 0.0
    %708 = vmatpush.msra.mxu0 0.0
    %709 = vmatpush.msra.mxu0 0.0
    %710 = vmatpush.msra.mxu0 0.0
    %711 = vmatpush.msra.mxu0 0.0
    %712 = vmatpush.msra.mxu0 0.0
    %713 = vmatpush.msra.mxu0 %v269
    %714 = vmatpush.msra.mxu0 %v266
    %715 = vmatmul.f32.gmra.mxu0 %v282
    %v716 = vpop.f32.mrf.mxu0
    %v717 = vadd.f32 0.0, %v716
    %718 = vmatmul.f32.gmra.mxu0 %v285
    %v719 = vpop.f32.mrf.mxu0
    %v720 = vadd.f32 0.0, %v719
    %721 = vmatmul.f32.gmra.mxu0 %v288
    %v722 = vpop.f32.mrf.mxu0
    %v723 = vadd.f32 0.0, %v722
    %724 = vmatmul.f32.gmra.mxu0 %v291
    %v725 = vpop.f32.mrf.mxu0
    %v726 = vadd.f32 0.0, %v725
    %727 = vdwg.mxu0
    %728 = vmatpush.msra.mxu0 0.0
    %729 = vmatpush.msra.mxu0 0.0
    %730 = vmatpush.msra.mxu0 0.0
    %731 = vmatpush.msra.mxu0 0.0
    %732 = vmatpush.msra.mxu0 0.0
    %733 = vmatpush.msra.mxu0 0.0
    %734 = vmatpush.msra.mxu0 0.0
    %735 = vmatpush.msra.mxu0 0.0
    %736 = vmatpush.msra.mxu0 0.0
    %737 = vmatpush.msra.mxu0 0.0
    %738 = vmatpush.msra.mxu0 0.0
    %739 = vmatpush.msra.mxu0 0.0
    %740 = vmatpush.msra.mxu0 0.0
    %741 = vmatpush.msra.mxu0 0.0
    %742 = vmatpush.msra.mxu0 %v275
    %743 = vmatpush.msra.mxu0 %v272
    %744 = vmatmul.f32.gmra.mxu0 %v282
    %v745 = vpop.f32.mrf.mxu0
    %v746 = vadd.f32 0.0, %v745
    %747 = vmatmul.f32.gmra.mxu0 %v285
    %v748 = vpop.f32.mrf.mxu0
    %v749 = vadd.f32 0.0, %v748
    %750 = vmatmul.f32.gmra.mxu0 %v288
    %v751 = vpop.f32.mrf.mxu0
    %v752 = vadd.f32 0.0, %v751
    %753 = vmatmul.f32.gmra.mxu0 %v291
    %v754 = vpop.f32.mrf.mxu0
    %v755 = vadd.f32 0.0, %v754
    %756 = vdwg.mxu0
    %v757 = vrot.slane %v369, 4
    %vm758 = vcmask 1047556
    %v759 = vsel %vm758, %v757, %v311
    %v760 = vrot.slane %v311, 4
    %v761 = vsel %vm758, %v369, %v760
    %v763 = vunpack.c.l.s4 1983009808
    %v764 = vunpack.c.0.s8 %v763
    %v765 = vperm.slane %v759, %v764
    %v767 = vunpack.c.l.s4 1983009808
    %v768 = vunpack.c.0.s8 %v767
    %v769 = vperm.slane %v761, %v768
    %v770 = vrot.slane %v398, 4
    %v771 = vsel %vm758, %v770, %v340
    %v772 = vrot.slane %v340, 4
    %v773 = vsel %vm758, %v398, %v772
    %v775 = vunpack.c.l.s4 1983009808
    %v776 = vunpack.c.0.s8 %v775
    %v777 = vperm.slane %v771, %v776
    %v779 = vunpack.c.l.s4 1983009808
    %v780 = vunpack.c.0.s8 %v779
    %v781 = vperm.slane %v773, %v780
    %v782 = vrot.slane %v485, 4
    %v783 = vsel %vm758, %v782, %v427
    %v784 = vrot.slane %v427, 4
    %v785 = vsel %vm758, %v485, %v784
    %v787 = vunpack.c.l.s4 1983009808
    %v788 = vunpack.c.0.s8 %v787
    %v789 = vperm.slane %v783, %v788
    %v791 = vunpack.c.l.s4 1983009808
    %v792 = vunpack.c.0.s8 %v791
    %v793 = vperm.slane %v785, %v792
    %v794 = vrot.slane %v514, 4
    %v795 = vsel %vm758, %v794, %v456
    %v796 = vrot.slane %v456, 4
    %v797 = vsel %vm758, %v514, %v796
    %v799 = vunpack.c.l.s4 1983009808
    %v800 = vunpack.c.0.s8 %v799
    %v801 = vperm.slane %v795, %v800
    %v803 = vunpack.c.l.s4 1983009808
    %v804 = vunpack.c.0.s8 %v803
    %v805 = vperm.slane %v797, %v804
    %v806 = vrot.slane %v777, 4
    %v807 = vsel %vm758, %v806, %v765
    %v808 = vrot.slane %v765, 4
    %v809 = vsel %vm758, %v777, %v808
    %v811 = vunpack.c.l.s4 1934713408
    %v812 = vunpack.c.0.s8 %v811
    %v813 = vperm.slane %v807, %v812
    %v815 = vunpack.c.l.s4 1934713408
    %v816 = vunpack.c.0.s8 %v815
    %v817 = vperm.slane %v809, %v816
    %v818 = vrot.slane %v781, 4
    %v819 = vsel %vm758, %v818, %v769
    %v820 = vrot.slane %v769, 4
    %v821 = vsel %vm758, %v781, %v820
    %v823 = vunpack.c.l.s4 1934713408
    %v824 = vunpack.c.0.s8 %v823
    %v825 = vperm.slane %v819, %v824
    %v827 = vunpack.c.l.s4 1934713408
    %v828 = vunpack.c.0.s8 %v827
    %v829 = vperm.slane %v821, %v828
    %v830 = vrot.slane %v801, 4
    %v831 = vsel %vm758, %v830, %v789
    %v832 = vrot.slane %v789, 4
    %v833 = vsel %vm758, %v801, %v832
    %v835 = vunpack.c.l.s4 1934713408
    %v836 = vunpack.c.0.s8 %v835
    %v837 = vperm.slane %v831, %v836
    %v839 = vunpack.c.l.s4 1934713408
    %v840 = vunpack.c.0.s8 %v839
    %v841 = vperm.slane %v833, %v840
    %v842 = vrot.slane %v805, 4
    %v843 = vsel %vm758, %v842, %v793
    %v844 = vrot.slane %v793, 4
    %v845 = vsel %vm758, %v805, %v844
    %v847 = vunpack.c.l.s4 1934713408
    %v848 = vunpack.c.0.s8 %v847
    %v849 = vperm.slane %v843, %v848
    %v851 = vunpack.c.l.s4 1934713408
    %v852 = vunpack.c.0.s8 %v851
    %v853 = vperm.slane %v845, %v852
    %v854 = vrot.slane %v837, 4
    %v855 = vsel %vm758, %v854, %v813
    %v856 = vrot.slane %v813, 4
    %v857 = vsel %vm758, %v837, %v856
    %v858 = vrot.slane %v841, 4
    %v859 = vsel %vm758, %v858, %v817
    %v860 = vrot.slane %v817, 4
    %v861 = vsel %vm758, %v841, %v860
    %v862 = vrot.slane %v849, 4
    %v863 = vsel %vm758, %v862, %v825
    %v864 = vrot.slane %v825, 4
    %v865 = vsel %vm758, %v849, %v864
    %v866 = vrot.slane %v853, 4
    %v867 = vsel %vm758, %v866, %v829
    %v868 = vrot.slane %v829, 4
    %v869 = vsel %vm758, %v853, %v868
    %v870 = vrot.slane %v601, 4
    %v871 = vsel %vm758, %v870, %v543
    %v872 = vrot.slane %v543, 4
    %v873 = vsel %vm758, %v601, %v872
    %v875 = vunpack.c.l.s4 1983009808
    %v876 = vunpack.c.0.s8 %v875
    %v877 = vperm.slane %v871, %v876
    %v879 = vunpack.c.l.s4 1983009808
    %v880 = vunpack.c.0.s8 %v879
    %v881 = vperm.slane %v873, %v880
    %v882 = vrot.slane %v630, 4
    %v883 = vsel %vm758, %v882, %v572
    %v884 = vrot.slane %v572, 4
    %v885 = vsel %vm758, %v630, %v884
    %v887 = vunpack.c.l.s4 1983009808
    %v888 = vunpack.c.0.s8 %v887
    %v889 = vperm.slane %v883, %v888
    %v891 = vunpack.c.l.s4 1983009808
    %v892 = vunpack.c.0.s8 %v891
    %v893 = vperm.slane %v885, %v892
    %v894 = vrot.slane %v717, 4
    %v895 = vsel %vm758, %v894, %v659
    %v896 = vrot.slane %v659, 4
    %v897 = vsel %vm758, %v717, %v896
    %v899 = vunpack.c.l.s4 1983009808
    %v900 = vunpack.c.0.s8 %v899
    %v901 = vperm.slane %v895, %v900
    %v903 = vunpack.c.l.s4 1983009808
    %v904 = vunpack.c.0.s8 %v903
    %v905 = vperm.slane %v897, %v904
    %v906 = vrot.slane %v746, 4
    %v907 = vsel %vm758, %v906, %v688
    %v908 = vrot.slane %v688, 4
    %v909 = vsel %vm758, %v746, %v908
    %v911 = vunpack.c.l.s4 1983009808
    %v912 = vunpack.c.0.s8 %v911
    %v913 = vperm.slane %v907, %v912
    %v915 = vunpack.c.l.s4 1983009808
    %v916 = vunpack.c.0.s8 %v915
    %v917 = vperm.slane %v909, %v916
    %v918 = vrot.slane %v889, 4
    %v919 = vsel %vm758, %v918, %v877
    %v920 = vrot.slane %v877, 4
    %v921 = vsel %vm758, %v889, %v920
    %v923 = vunpack.c.l.s4 1934713408
    %v924 = vunpack.c.0.s8 %v923
    %v925 = vperm.slane %v919, %v924
    %v927 = vunpack.c.l.s4 1934713408
    %v928 = vunpack.c.0.s8 %v927
    %v929 = vperm.slane %v921, %v928
    %v930 = vrot.slane %v893, 4
    %v931 = vsel %vm758, %v930, %v881
    %v932 = vrot.slane %v881, 4
    %v933 = vsel %vm758, %v893, %v932
    %v935 = vunpack.c.l.s4 1934713408
    %v936 = vunpack.c.0.s8 %v935
    %v937 = vperm.slane %v931, %v936
    %v939 = vunpack.c.l.s4 1934713408
    %v940 = vunpack.c.0.s8 %v939
    %v941 = vperm.slane %v933, %v940
    %v942 = vrot.slane %v913, 4
    %v943 = vsel %vm758, %v942, %v901
    %v944 = vrot.slane %v901, 4
    %v945 = vsel %vm758, %v913, %v944
    %v947 = vunpack.c.l.s4 1934713408
    %v948 = vunpack.c.0.s8 %v947
    %v949 = vperm.slane %v943, %v948
    %v951 = vunpack.c.l.s4 1934713408
    %v952 = vunpack.c.0.s8 %v951
    %v953 = vperm.slane %v945, %v952
    %v954 = vrot.slane %v917, 4
    %v955 = vsel %vm758, %v954, %v905
    %v956 = vrot.slane %v905, 4
    %v957 = vsel %vm758, %v917, %v956
    %v959 = vunpack.c.l.s4 1934713408
    %v960 = vunpack.c.0.s8 %v959
    %v961 = vperm.slane %v955, %v960
    %v963 = vunpack.c.l.s4 1934713408
    %v964 = vunpack.c.0.s8 %v963
    %v965 = vperm.slane %v957, %v964
    %v966 = vrot.slane %v949, 4
    %v967 = vsel %vm758, %v966, %v925
    %v968 = vrot.slane %v925, 4
    %v969 = vsel %vm758, %v949, %v968
    %v970 = vrot.slane %v953, 4
    %v971 = vsel %vm758, %v970, %v929
    %v972 = vrot.slane %v929, 4
    %v973 = vsel %vm758, %v953, %v972
    %v974 = vrot.slane %v961, 4
    %v975 = vsel %vm758, %v974, %v937
    %v976 = vrot.slane %v937, 4
    %v977 = vsel %vm758, %v961, %v976
    %v978 = vrot.slane %v965, 4
    %v979 = vsel %vm758, %v978, %v941
    %v980 = vrot.slane %v941, 4
    %v981 = vsel %vm758, %v965, %v980
    %v982 = vrot.slane %v372, 4
    %v983 = vsel %vm758, %v982, %v314
    %v984 = vrot.slane %v314, 4
    %v985 = vsel %vm758, %v372, %v984
    %v987 = vunpack.c.l.s4 1983009808
    %v988 = vunpack.c.0.s8 %v987
    %v989 = vperm.slane %v983, %v988
    %v991 = vunpack.c.l.s4 1983009808
    %v992 = vunpack.c.0.s8 %v991
    %v993 = vperm.slane %v985, %v992
    %v994 = vrot.slane %v401, 4
    %v995 = vsel %vm758, %v994, %v343
    %v996 = vrot.slane %v343, 4
    %v997 = vsel %vm758, %v401, %v996
    %v999 = vunpack.c.l.s4 1983009808
    %v1000 = vunpack.c.0.s8 %v999
    %v1001 = vperm.slane %v995, %v1000
    %v1003 = vunpack.c.l.s4 1983009808
    %v1004 = vunpack.c.0.s8 %v1003
    %v1005 = vperm.slane %v997, %v1004
    %v1006 = vrot.slane %v488, 4
    %v1007 = vsel %vm758, %v1006, %v430
    %v1008 = vrot.slane %v430, 4
    %v1009 = vsel %vm758, %v488, %v1008
    %v1011 = vunpack.c.l.s4 1983009808
    %v1012 = vunpack.c.0.s8 %v1011
    %v1013 = vperm.slane %v1007, %v1012
    %v1015 = vunpack.c.l.s4 1983009808
    %v1016 = vunpack.c.0.s8 %v1015
    %v1017 = vperm.slane %v1009, %v1016
    %v1018 = vrot.slane %v517, 4
    %v1019 = vsel %vm758, %v1018, %v459
    %v1020 = vrot.slane %v459, 4
    %v1021 = vsel %vm758, %v517, %v1020
    %v1023 = vunpack.c.l.s4 1983009808
    %v1024 = vunpack.c.0.s8 %v1023
    %v1025 = vperm.slane %v1019, %v1024
    %v1027 = vunpack.c.l.s4 1983009808
    %v1028 = vunpack.c.0.s8 %v1027
    %v1029 = vperm.slane %v1021, %v1028
    %v1030 = vrot.slane %v1001, 4
    %v1031 = vsel %vm758, %v1030, %v989
    %v1032 = vrot.slane %v989, 4
    %v1033 = vsel %vm758, %v1001, %v1032
    %v1035 = vunpack.c.l.s4 1934713408
    %v1036 = vunpack.c.0.s8 %v1035
    %v1037 = vperm.slane %v1031, %v1036
    %v1039 = vunpack.c.l.s4 1934713408
    %v1040 = vunpack.c.0.s8 %v1039
    %v1041 = vperm.slane %v1033, %v1040
    %v1042 = vrot.slane %v1005, 4
    %v1043 = vsel %vm758, %v1042, %v993
    %v1044 = vrot.slane %v993, 4
    %v1045 = vsel %vm758, %v1005, %v1044
    %v1047 = vunpack.c.l.s4 1934713408
    %v1048 = vunpack.c.0.s8 %v1047
    %v1049 = vperm.slane %v1043, %v1048
    %v1051 = vunpack.c.l.s4 1934713408
    %v1052 = vunpack.c.0.s8 %v1051
    %v1053 = vperm.slane %v1045, %v1052
    %v1054 = vrot.slane %v1025, 4
    %v1055 = vsel %vm758, %v1054, %v1013
    %v1056 = vrot.slane %v1013, 4
    %v1057 = vsel %vm758, %v1025, %v1056
    %v1059 = vunpack.c.l.s4 1934713408
    %v1060 = vunpack.c.0.s8 %v1059
    %v1061 = vperm.slane %v1055, %v1060
    %v1063 = vunpack.c.l.s4 1934713408
    %v1064 = vunpack.c.0.s8 %v1063
    %v1065 = vperm.slane %v1057, %v1064
    %v1066 = vrot.slane %v1029, 4
    %v1067 = vsel %vm758, %v1066, %v1017
    %v1068 = vrot.slane %v1017, 4
    %v1069 = vsel %vm758, %v1029, %v1068
    %v1071 = vunpack.c.l.s4 1934713408
    %v1072 = vunpack.c.0.s8 %v1071
    %v1073 = vperm.slane %v1067, %v1072
    %v1075 = vunpack.c.l.s4 1934713408
    %v1076 = vunpack.c.0.s8 %v1075
    %v1077 = vperm.slane %v1069, %v1076
    %v1078 = vrot.slane %v1061, 4
    %v1079 = vsel %vm758, %v1078, %v1037
    %v1080 = vrot.slane %v1037, 4
    %v1081 = vsel %vm758, %v1061, %v1080
    %v1082 = vrot.slane %v1065, 4
    %v1083 = vsel %vm758, %v1082, %v1041
    %v1084 = vrot.slane %v1041, 4
    %v1085 = vsel %vm758, %v1065, %v1084
    %v1086 = vrot.slane %v1073, 4
    %v1087 = vsel %vm758, %v1086, %v1049
    %v1088 = vrot.slane %v1049, 4
    %v1089 = vsel %vm758, %v1073, %v1088
    %v1090 = vrot.slane %v1077, 4
    %v1091 = vsel %vm758, %v1090, %v1053
    %v1092 = vrot.slane %v1053, 4
    %v1093 = vsel %vm758, %v1077, %v1092
    %v1094 = vrot.slane %v604, 4
    %v1095 = vsel %vm758, %v1094, %v546
    %v1096 = vrot.slane %v546, 4
    %v1097 = vsel %vm758, %v604, %v1096
    %v1099 = vunpack.c.l.s4 1983009808
    %v1100 = vunpack.c.0.s8 %v1099
    %v1101 = vperm.slane %v1095, %v1100
    %v1103 = vunpack.c.l.s4 1983009808
    %v1104 = vunpack.c.0.s8 %v1103
    %v1105 = vperm.slane %v1097, %v1104
    %v1106 = vrot.slane %v633, 4
    %v1107 = vsel %vm758, %v1106, %v575
    %v1108 = vrot.slane %v575, 4
    %v1109 = vsel %vm758, %v633, %v1108
    %v1111 = vunpack.c.l.s4 1983009808
    %v1112 = vunpack.c.0.s8 %v1111
    %v1113 = vperm.slane %v1107, %v1112
    %v1115 = vunpack.c.l.s4 1983009808
    %v1116 = vunpack.c.0.s8 %v1115
    %v1117 = vperm.slane %v1109, %v1116
    %v1118 = vrot.slane %v720, 4
    %v1119 = vsel %vm758, %v1118, %v662
    %v1120 = vrot.slane %v662, 4
    %v1121 = vsel %vm758, %v720, %v1120
    %v1123 = vunpack.c.l.s4 1983009808
    %v1124 = vunpack.c.0.s8 %v1123
    %v1125 = vperm.slane %v1119, %v1124
    %v1127 = vunpack.c.l.s4 1983009808
    %v1128 = vunpack.c.0.s8 %v1127
    %v1129 = vperm.slane %v1121, %v1128
    %v1130 = vrot.slane %v749, 4
    %v1131 = vsel %vm758, %v1130, %v691
    %v1132 = vrot.slane %v691, 4
    %v1133 = vsel %vm758, %v749, %v1132
    %v1135 = vunpack.c.l.s4 1983009808
    %v1136 = vunpack.c.0.s8 %v1135
    %v1137 = vperm.slane %v1131, %v1136
    %v1139 = vunpack.c.l.s4 1983009808
    %v1140 = vunpack.c.0.s8 %v1139
    %v1141 = vperm.slane %v1133, %v1140
    %v1142 = vrot.slane %v1113, 4
    %v1143 = vsel %vm758, %v1142, %v1101
    %v1144 = vrot.slane %v1101, 4
    %v1145 = vsel %vm758, %v1113, %v1144
    %v1147 = vunpack.c.l.s4 1934713408
    %v1148 = vunpack.c.0.s8 %v1147
    %v1149 = vperm.slane %v1143, %v1148
    %v1151 = vunpack.c.l.s4 1934713408
    %v1152 = vunpack.c.0.s8 %v1151
    %v1153 = vperm.slane %v1145, %v1152
    %v1154 = vrot.slane %v1117, 4
    %v1155 = vsel %vm758, %v1154, %v1105
    %v1156 = vrot.slane %v1105, 4
    %v1157 = vsel %vm758, %v1117, %v1156
    %v1159 = vunpack.c.l.s4 1934713408
    %v1160 = vunpack.c.0.s8 %v1159
    %v1161 = vperm.slane %v1155, %v1160
    %v1163 = vunpack.c.l.s4 1934713408
    %v1164 = vunpack.c.0.s8 %v1163
    %v1165 = vperm.slane %v1157, %v1164
    %v1166 = vrot.slane %v1137, 4
    %v1167 = vsel %vm758, %v1166, %v1125
    %v1168 = vrot.slane %v1125, 4
    %v1169 = vsel %vm758, %v1137, %v1168
    %v1171 = vunpack.c.l.s4 1934713408
    %v1172 = vunpack.c.0.s8 %v1171
    %v1173 = vperm.slane %v1167, %v1172
    %v1175 = vunpack.c.l.s4 1934713408
    %v1176 = vunpack.c.0.s8 %v1175
    %v1177 = vperm.slane %v1169, %v1176
    %v1178 = vrot.slane %v1141, 4
    %v1179 = vsel %vm758, %v1178, %v1129
    %v1180 = vrot.slane %v1129, 4
    %v1181 = vsel %vm758, %v1141, %v1180
    %v1183 = vunpack.c.l.s4 1934713408
    %v1184 = vunpack.c.0.s8 %v1183
    %v1185 = vperm.slane %v1179, %v1184
    %v1187 = vunpack.c.l.s4 1934713408
    %v1188 = vunpack.c.0.s8 %v1187
    %v1189 = vperm.slane %v1181, %v1188
    %v1190 = vrot.slane %v1173, 4
    %v1191 = vsel %vm758, %v1190, %v1149
    %v1192 = vrot.slane %v1149, 4
    %v1193 = vsel %vm758, %v1173, %v1192
    %v1194 = vrot.slane %v1177, 4
    %v1195 = vsel %vm758, %v1194, %v1153
    %v1196 = vrot.slane %v1153, 4
    %v1197 = vsel %vm758, %v1177, %v1196
    %v1198 = vrot.slane %v1185, 4
    %v1199 = vsel %vm758, %v1198, %v1161
    %v1200 = vrot.slane %v1161, 4
    %v1201 = vsel %vm758, %v1185, %v1200
    %v1202 = vrot.slane %v1189, 4
    %v1203 = vsel %vm758, %v1202, %v1165
    %v1204 = vrot.slane %v1165, 4
    %v1205 = vsel %vm758, %v1189, %v1204
    %v1206 = vrot.slane %v375, 4
    %v1207 = vsel %vm758, %v1206, %v317
    %v1208 = vrot.slane %v317, 4
    %v1209 = vsel %vm758, %v375, %v1208
    %v1211 = vunpack.c.l.s4 1983009808
    %v1212 = vunpack.c.0.s8 %v1211
    %v1213 = vperm.slane %v1207, %v1212
    %v1215 = vunpack.c.l.s4 1983009808
    %v1216 = vunpack.c.0.s8 %v1215
    %v1217 = vperm.slane %v1209, %v1216
    %v1218 = vrot.slane %v404, 4
    %v1219 = vsel %vm758, %v1218, %v346
    %v1220 = vrot.slane %v346, 4
    %v1221 = vsel %vm758, %v404, %v1220
    %v1223 = vunpack.c.l.s4 1983009808
    %v1224 = vunpack.c.0.s8 %v1223
    %v1225 = vperm.slane %v1219, %v1224
    %v1227 = vunpack.c.l.s4 1983009808
    %v1228 = vunpack.c.0.s8 %v1227
    %v1229 = vperm.slane %v1221, %v1228
    %v1230 = vrot.slane %v491, 4
    %v1231 = vsel %vm758, %v1230, %v433
    %v1232 = vrot.slane %v433, 4
    %v1233 = vsel %vm758, %v491, %v1232
    %v1235 = vunpack.c.l.s4 1983009808
    %v1236 = vunpack.c.0.s8 %v1235
    %v1237 = vperm.slane %v1231, %v1236
    %v1239 = vunpack.c.l.s4 1983009808
    %v1240 = vunpack.c.0.s8 %v1239
    %v1241 = vperm.slane %v1233, %v1240
    %v1242 = vrot.slane %v520, 4
    %v1243 = vsel %vm758, %v1242, %v462
    %v1244 = vrot.slane %v462, 4
    %v1245 = vsel %vm758, %v520, %v1244
    %v1247 = vunpack.c.l.s4 1983009808
    %v1248 = vunpack.c.0.s8 %v1247
    %v1249 = vperm.slane %v1243, %v1248
    %v1251 = vunpack.c.l.s4 1983009808
    %v1252 = vunpack.c.0.s8 %v1251
    %v1253 = vperm.slane %v1245, %v1252
    %v1254 = vrot.slane %v1225, 4
    %v1255 = vsel %vm758, %v1254, %v1213
    %v1256 = vrot.slane %v1213, 4
    %v1257 = vsel %vm758, %v1225, %v1256
    %v1259 = vunpack.c.l.s4 1934713408
    %v1260 = vunpack.c.0.s8 %v1259
    %v1261 = vperm.slane %v1255, %v1260
    %v1263 = vunpack.c.l.s4 1934713408
    %v1264 = vunpack.c.0.s8 %v1263
    %v1265 = vperm.slane %v1257, %v1264
    %v1266 = vrot.slane %v1229, 4
    %v1267 = vsel %vm758, %v1266, %v1217
    %v1268 = vrot.slane %v1217, 4
    %v1269 = vsel %vm758, %v1229, %v1268
    %v1271 = vunpack.c.l.s4 1934713408
    %v1272 = vunpack.c.0.s8 %v1271
    %v1273 = vperm.slane %v1267, %v1272
    %v1275 = vunpack.c.l.s4 1934713408
    %v1276 = vunpack.c.0.s8 %v1275
    %v1277 = vperm.slane %v1269, %v1276
    %v1278 = vrot.slane %v1249, 4
    %v1279 = vsel %vm758, %v1278, %v1237
    %v1280 = vrot.slane %v1237, 4
    %v1281 = vsel %vm758, %v1249, %v1280
    %v1283 = vunpack.c.l.s4 1934713408
    %v1284 = vunpack.c.0.s8 %v1283
    %v1285 = vperm.slane %v1279, %v1284
    %v1287 = vunpack.c.l.s4 1934713408
    %v1288 = vunpack.c.0.s8 %v1287
    %v1289 = vperm.slane %v1281, %v1288
    %v1290 = vrot.slane %v1253, 4
    %v1291 = vsel %vm758, %v1290, %v1241
    %v1292 = vrot.slane %v1241, 4
    %v1293 = vsel %vm758, %v1253, %v1292
    %v1295 = vunpack.c.l.s4 1934713408
    %v1296 = vunpack.c.0.s8 %v1295
    %v1297 = vperm.slane %v1291, %v1296
    %v1299 = vunpack.c.l.s4 1934713408
    %v1300 = vunpack.c.0.s8 %v1299
    %v1301 = vperm.slane %v1293, %v1300
    %v1302 = vrot.slane %v1285, 4
    %v1303 = vsel %vm758, %v1302, %v1261
    %v1304 = vrot.slane %v1261, 4
    %v1305 = vsel %vm758, %v1285, %v1304
    %v1306 = vrot.slane %v1289, 4
    %v1307 = vsel %vm758, %v1306, %v1265
    %v1308 = vrot.slane %v1265, 4
    %v1309 = vsel %vm758, %v1289, %v1308
    %v1310 = vrot.slane %v1297, 4
    %v1311 = vsel %vm758, %v1310, %v1273
    %v1312 = vrot.slane %v1273, 4
    %v1313 = vsel %vm758, %v1297, %v1312
    %v1314 = vrot.slane %v1301, 4
    %v1315 = vsel %vm758, %v1314, %v1277
    %v1316 = vrot.slane %v1277, 4
    %v1317 = vsel %vm758, %v1301, %v1316
    %v1318 = vrot.slane %v607, 4
    %v1319 = vsel %vm758, %v1318, %v549
    %v1320 = vrot.slane %v549, 4
    %v1321 = vsel %vm758, %v607, %v1320
    %v1323 = vunpack.c.l.s4 1983009808
    %v1324 = vunpack.c.0.s8 %v1323
    %v1325 = vperm.slane %v1319, %v1324
    %v1327 = vunpack.c.l.s4 1983009808
    %v1328 = vunpack.c.0.s8 %v1327
    %v1329 = vperm.slane %v1321, %v1328
    %v1330 = vrot.slane %v636, 4
    %v1331 = vsel %vm758, %v1330, %v578
    %v1332 = vrot.slane %v578, 4
    %v1333 = vsel %vm758, %v636, %v1332
    %v1335 = vunpack.c.l.s4 1983009808
    %v1336 = vunpack.c.0.s8 %v1335
    %v1337 = vperm.slane %v1331, %v1336
    %v1339 = vunpack.c.l.s4 1983009808
    %v1340 = vunpack.c.0.s8 %v1339
    %v1341 = vperm.slane %v1333, %v1340
    %v1342 = vrot.slane %v723, 4
    %v1343 = vsel %vm758, %v1342, %v665
    %v1344 = vrot.slane %v665, 4
    %v1345 = vsel %vm758, %v723, %v1344
    %v1347 = vunpack.c.l.s4 1983009808
    %v1348 = vunpack.c.0.s8 %v1347
    %v1349 = vperm.slane %v1343, %v1348
    %v1351 = vunpack.c.l.s4 1983009808
    %v1352 = vunpack.c.0.s8 %v1351
    %v1353 = vperm.slane %v1345, %v1352
    %v1354 = vrot.slane %v752, 4
    %v1355 = vsel %vm758, %v1354, %v694
    %v1356 = vrot.slane %v694, 4
    %v1357 = vsel %vm758, %v752, %v1356
    %v1359 = vunpack.c.l.s4 1983009808
    %v1360 = vunpack.c.0.s8 %v1359
    %v1361 = vperm.slane %v1355, %v1360
    %v1363 = vunpack.c.l.s4 1983009808
    %v1364 = vunpack.c.0.s8 %v1363
    %v1365 = vperm.slane %v1357, %v1364
    %v1366 = vrot.slane %v1337, 4
    %v1367 = vsel %vm758, %v1366, %v1325
    %v1368 = vrot.slane %v1325, 4
    %v1369 = vsel %vm758, %v1337, %v1368
    %v1371 = vunpack.c.l.s4 1934713408
    %v1372 = vunpack.c.0.s8 %v1371
    %v1373 = vperm.slane %v1367, %v1372
    %v1375 = vunpack.c.l.s4 1934713408
    %v1376 = vunpack.c.0.s8 %v1375
    %v1377 = vperm.slane %v1369, %v1376
    %v1378 = vrot.slane %v1341, 4
    %v1379 = vsel %vm758, %v1378, %v1329
    %v1380 = vrot.slane %v1329, 4
    %v1381 = vsel %vm758, %v1341, %v1380
    %v1383 = vunpack.c.l.s4 1934713408
    %v1384 = vunpack.c.0.s8 %v1383
    %v1385 = vperm.slane %v1379, %v1384
    %v1387 = vunpack.c.l.s4 1934713408
    %v1388 = vunpack.c.0.s8 %v1387
    %v1389 = vperm.slane %v1381, %v1388
    %v1390 = vrot.slane %v1361, 4
    %v1391 = vsel %vm758, %v1390, %v1349
    %v1392 = vrot.slane %v1349, 4
    %v1393 = vsel %vm758, %v1361, %v1392
    %v1395 = vunpack.c.l.s4 1934713408
    %v1396 = vunpack.c.0.s8 %v1395
    %v1397 = vperm.slane %v1391, %v1396
    %v1399 = vunpack.c.l.s4 1934713408
    %v1400 = vunpack.c.0.s8 %v1399
    %v1401 = vperm.slane %v1393, %v1400
    %v1402 = vrot.slane %v1365, 4
    %v1403 = vsel %vm758, %v1402, %v1353
    %v1404 = vrot.slane %v1353, 4
    %v1405 = vsel %vm758, %v1365, %v1404
    %v1407 = vunpack.c.l.s4 1934713408
    %v1408 = vunpack.c.0.s8 %v1407
    %v1409 = vperm.slane %v1403, %v1408
    %v1411 = vunpack.c.l.s4 1934713408
    %v1412 = vunpack.c.0.s8 %v1411
    %v1413 = vperm.slane %v1405, %v1412
    %v1414 = vrot.slane %v1397, 4
    %v1415 = vsel %vm758, %v1414, %v1373
    %v1416 = vrot.slane %v1373, 4
    %v1417 = vsel %vm758, %v1397, %v1416
    %v1418 = vrot.slane %v1401, 4
    %v1419 = vsel %vm758, %v1418, %v1377
    %v1420 = vrot.slane %v1377, 4
    %v1421 = vsel %vm758, %v1401, %v1420
    %v1422 = vrot.slane %v1409, 4
    %v1423 = vsel %vm758, %v1422, %v1385
    %v1424 = vrot.slane %v1385, 4
    %v1425 = vsel %vm758, %v1409, %v1424
    %v1426 = vrot.slane %v1413, 4
    %v1427 = vsel %vm758, %v1426, %v1389
    %v1428 = vrot.slane %v1389, 4
    %v1429 = vsel %vm758, %v1413, %v1428
    %v1430 = vrot.slane %v378, 4
    %v1431 = vsel %vm758, %v1430, %v320
    %v1432 = vrot.slane %v320, 4
    %v1433 = vsel %vm758, %v378, %v1432
    %v1435 = vunpack.c.l.s4 1983009808
    %v1436 = vunpack.c.0.s8 %v1435
    %v1437 = vperm.slane %v1431, %v1436
    %v1439 = vunpack.c.l.s4 1983009808
    %v1440 = vunpack.c.0.s8 %v1439
    %v1441 = vperm.slane %v1433, %v1440
    %v1442 = vrot.slane %v407, 4
    %v1443 = vsel %vm758, %v1442, %v349
    %v1444 = vrot.slane %v349, 4
    %v1445 = vsel %vm758, %v407, %v1444
    %v1447 = vunpack.c.l.s4 1983009808
    %v1448 = vunpack.c.0.s8 %v1447
    %v1449 = vperm.slane %v1443, %v1448
    %v1451 = vunpack.c.l.s4 1983009808
    %v1452 = vunpack.c.0.s8 %v1451
    %v1453 = vperm.slane %v1445, %v1452
    %v1454 = vrot.slane %v494, 4
    %v1455 = vsel %vm758, %v1454, %v436
    %v1456 = vrot.slane %v436, 4
    %v1457 = vsel %vm758, %v494, %v1456
    %v1459 = vunpack.c.l.s4 1983009808
    %v1460 = vunpack.c.0.s8 %v1459
    %v1461 = vperm.slane %v1455, %v1460
    %v1463 = vunpack.c.l.s4 1983009808
    %v1464 = vunpack.c.0.s8 %v1463
    %v1465 = vperm.slane %v1457, %v1464
    %v1466 = vrot.slane %v523, 4
    %v1467 = vsel %vm758, %v1466, %v465
    %v1468 = vrot.slane %v465, 4
    %v1469 = vsel %vm758, %v523, %v1468
    %v1471 = vunpack.c.l.s4 1983009808
    %v1472 = vunpack.c.0.s8 %v1471
    %v1473 = vperm.slane %v1467, %v1472
    %v1475 = vunpack.c.l.s4 1983009808
    %v1476 = vunpack.c.0.s8 %v1475
    %v1477 = vperm.slane %v1469, %v1476
    %v1478 = vrot.slane %v1449, 4
    %v1479 = vsel %vm758, %v1478, %v1437
    %v1480 = vrot.slane %v1437, 4
    %v1481 = vsel %vm758, %v1449, %v1480
    %v1483 = vunpack.c.l.s4 1934713408
    %v1484 = vunpack.c.0.s8 %v1483
    %v1485 = vperm.slane %v1479, %v1484
    %v1487 = vunpack.c.l.s4 1934713408
    %v1488 = vunpack.c.0.s8 %v1487
    %v1489 = vperm.slane %v1481, %v1488
    %v1490 = vrot.slane %v1453, 4
    %v1491 = vsel %vm758, %v1490, %v1441
    %v1492 = vrot.slane %v1441, 4
    %v1493 = vsel %vm758, %v1453, %v1492
    %v1495 = vunpack.c.l.s4 1934713408
    %v1496 = vunpack.c.0.s8 %v1495
    %v1497 = vperm.slane %v1491, %v1496
    %v1499 = vunpack.c.l.s4 1934713408
    %v1500 = vunpack.c.0.s8 %v1499
    %v1501 = vperm.slane %v1493, %v1500
    %v1502 = vrot.slane %v1473, 4
    %v1503 = vsel %vm758, %v1502, %v1461
    %v1504 = vrot.slane %v1461, 4
    %v1505 = vsel %vm758, %v1473, %v1504
    %v1507 = vunpack.c.l.s4 1934713408
    %v1508 = vunpack.c.0.s8 %v1507
    %v1509 = vperm.slane %v1503, %v1508
    %v1511 = vunpack.c.l.s4 1934713408
    %v1512 = vunpack.c.0.s8 %v1511
    %v1513 = vperm.slane %v1505, %v1512
    %v1514 = vrot.slane %v1477, 4
    %v1515 = vsel %vm758, %v1514, %v1465
    %v1516 = vrot.slane %v1465, 4
    %v1517 = vsel %vm758, %v1477, %v1516
    %v1519 = vunpack.c.l.s4 1934713408
    %v1520 = vunpack.c.0.s8 %v1519
    %v1521 = vperm.slane %v1515, %v1520
    %v1523 = vunpack.c.l.s4 1934713408
    %v1524 = vunpack.c.0.s8 %v1523
    %v1525 = vperm.slane %v1517, %v1524
    %v1526 = vrot.slane %v1509, 4
    %v1527 = vsel %vm758, %v1526, %v1485
    %v1528 = vrot.slane %v1485, 4
    %v1529 = vsel %vm758, %v1509, %v1528
    %v1530 = vrot.slane %v1513, 4
    %v1531 = vsel %vm758, %v1530, %v1489
    %v1532 = vrot.slane %v1489, 4
    %v1533 = vsel %vm758, %v1513, %v1532
    %v1534 = vrot.slane %v1521, 4
    %v1535 = vsel %vm758, %v1534, %v1497
    %v1536 = vrot.slane %v1497, 4
    %v1537 = vsel %vm758, %v1521, %v1536
    %v1538 = vrot.slane %v1525, 4
    %v1539 = vsel %vm758, %v1538, %v1501
    %v1540 = vrot.slane %v1501, 4
    %v1541 = vsel %vm758, %v1525, %v1540
    %v1542 = vrot.slane %v610, 4
    %v1543 = vsel %vm758, %v1542, %v552
    %v1544 = vrot.slane %v552, 4
    %v1545 = vsel %vm758, %v610, %v1544
    %v1547 = vunpack.c.l.s4 1983009808
    %v1548 = vunpack.c.0.s8 %v1547
    %v1549 = vperm.slane %v1543, %v1548
    %v1551 = vunpack.c.l.s4 1983009808
    %v1552 = vunpack.c.0.s8 %v1551
    %v1553 = vperm.slane %v1545, %v1552
    %v1554 = vrot.slane %v639, 4
    %v1555 = vsel %vm758, %v1554, %v581
    %v1556 = vrot.slane %v581, 4
    %v1557 = vsel %vm758, %v639, %v1556
    %v1559 = vunpack.c.l.s4 1983009808
    %v1560 = vunpack.c.0.s8 %v1559
    %v1561 = vperm.slane %v1555, %v1560
    %v1563 = vunpack.c.l.s4 1983009808
    %v1564 = vunpack.c.0.s8 %v1563
    %v1565 = vperm.slane %v1557, %v1564
    %v1566 = vrot.slane %v726, 4
    %v1567 = vsel %vm758, %v1566, %v668
    %v1568 = vrot.slane %v668, 4
    %v1569 = vsel %vm758, %v726, %v1568
    %v1571 = vunpack.c.l.s4 1983009808
    %v1572 = vunpack.c.0.s8 %v1571
    %v1573 = vperm.slane %v1567, %v1572
    %v1575 = vunpack.c.l.s4 1983009808
    %v1576 = vunpack.c.0.s8 %v1575
    %v1577 = vperm.slane %v1569, %v1576
    %v1578 = vrot.slane %v755, 4
    %v1579 = vsel %vm758, %v1578, %v697
    %v1580 = vrot.slane %v697, 4
    %v1581 = vsel %vm758, %v755, %v1580
    %v1583 = vunpack.c.l.s4 1983009808
    %v1584 = vunpack.c.0.s8 %v1583
    %v1585 = vperm.slane %v1579, %v1584
    %v1587 = vunpack.c.l.s4 1983009808
    %v1588 = vunpack.c.0.s8 %v1587
    %v1589 = vperm.slane %v1581, %v1588
    %v1590 = vrot.slane %v1561, 4
    %v1591 = vsel %vm758, %v1590, %v1549
    %v1592 = vrot.slane %v1549, 4
    %v1593 = vsel %vm758, %v1561, %v1592
    %v1595 = vunpack.c.l.s4 1934713408
    %v1596 = vunpack.c.0.s8 %v1595
    %v1597 = vperm.slane %v1591, %v1596
    %v1599 = vunpack.c.l.s4 1934713408
    %v1600 = vunpack.c.0.s8 %v1599
    %v1601 = vperm.slane %v1593, %v1600
    %v1602 = vrot.slane %v1565, 4
    %v1603 = vsel %vm758, %v1602, %v1553
    %v1604 = vrot.slane %v1553, 4
    %v1605 = vsel %vm758, %v1565, %v1604
    %v1607 = vunpack.c.l.s4 1934713408
    %v1608 = vunpack.c.0.s8 %v1607
    %v1609 = vperm.slane %v1603, %v1608
    %v1611 = vunpack.c.l.s4 1934713408
    %v1612 = vunpack.c.0.s8 %v1611
    %v1613 = vperm.slane %v1605, %v1612
    %v1614 = vrot.slane %v1585, 4
    %v1615 = vsel %vm758, %v1614, %v1573
    %v1616 = vrot.slane %v1573, 4
    %v1617 = vsel %vm758, %v1585, %v1616
    %v1619 = vunpack.c.l.s4 1934713408
    %v1620 = vunpack.c.0.s8 %v1619
    %v1621 = vperm.slane %v1615, %v1620
    %v1623 = vunpack.c.l.s4 1934713408
    %v1624 = vunpack.c.0.s8 %v1623
    %v1625 = vperm.slane %v1617, %v1624
    %v1626 = vrot.slane %v1589, 4
    %v1627 = vsel %vm758, %v1626, %v1577
    %v1628 = vrot.slane %v1577, 4
    %v1629 = vsel %vm758, %v1589, %v1628
    %v1631 = vunpack.c.l.s4 1934713408
    %v1632 = vunpack.c.0.s8 %v1631
    %v1633 = vperm.slane %v1627, %v1632
    %v1635 = vunpack.c.l.s4 1934713408
    %v1636 = vunpack.c.0.s8 %v1635
    %v1637 = vperm.slane %v1629, %v1636
    %v1638 = vrot.slane %v1621, 4
    %v1639 = vsel %vm758, %v1638, %v1597
    %v1640 = vrot.slane %v1597, 4
    %v1641 = vsel %vm758, %v1621, %v1640
    %v1642 = vrot.slane %v1625, 4
    %v1643 = vsel %vm758, %v1642, %v1601
    %v1644 = vrot.slane %v1601, 4
    %v1645 = vsel %vm758, %v1625, %v1644
    %v1646 = vrot.slane %v1633, 4
    %v1647 = vsel %vm758, %v1646, %v1609
    %v1648 = vrot.slane %v1609, 4
    %v1649 = vsel %vm758, %v1633, %v1648
    %v1650 = vrot.slane %v1637, 4
    %v1651 = vsel %vm758, %v1650, %v1613
    %v1652 = vrot.slane %v1613, 4
    %v1653 = vsel %vm758, %v1637, %v1652
    %1656 = vrot.lane.b32.xlu0 %v857, 32
    %v1657 = vpop.permute.xlu0 %1656
    %1658 = vrot.lane.b32.xlu0 %v969, 32
    %v1659 = vpop.permute.xlu0 %1658
    %1664 = vrot.lane.b32.xlu0 %v859, 64
    %v1665 = vpop.permute.xlu0 %1664
    %1666 = vrot.lane.b32.xlu0 %v971, 64
    %v1667 = vpop.permute.xlu0 %1666
    %1672 = vrot.lane.b32.xlu0 %v861, 96
    %v1673 = vpop.permute.xlu0 %1672
    %1674 = vrot.lane.b32.xlu0 %v973, 96
    %v1675 = vpop.permute.xlu0 %1674
    %1680 = vrot.lane.b32.xlu0 %v865, 32
    %v1681 = vpop.permute.xlu0 %1680
    %1682 = vrot.lane.b32.xlu0 %v977, 32
    %v1683 = vpop.permute.xlu0 %1682
    %1688 = vrot.lane.b32.xlu0 %v867, 64
    %v1689 = vpop.permute.xlu0 %1688
    %1690 = vrot.lane.b32.xlu0 %v979, 64
    %v1691 = vpop.permute.xlu0 %1690
    %1696 = vrot.lane.b32.xlu0 %v869, 96
    %v1697 = vpop.permute.xlu0 %1696
    %1698 = vrot.lane.b32.xlu0 %v981, 96
    %v1699 = vpop.permute.xlu0 %1698
    %1704 = vrot.lane.b32.xlu0 %v1081, 32
    %v1705 = vpop.permute.xlu0 %1704
    %1706 = vrot.lane.b32.xlu0 %v1193, 32
    %v1707 = vpop.permute.xlu0 %1706
    %1712 = vrot.lane.b32.xlu0 %v1083, 64
    %v1713 = vpop.permute.xlu0 %1712
    %1714 = vrot.lane.b32.xlu0 %v1195, 64
    %v1715 = vpop.permute.xlu0 %1714
    %1720 = vrot.lane.b32.xlu0 %v1085, 96
    %v1721 = vpop.permute.xlu0 %1720
    %1722 = vrot.lane.b32.xlu0 %v1197, 96
    %v1723 = vpop.permute.xlu0 %1722
    %1728 = vrot.lane.b32.xlu0 %v1089, 32
    %v1729 = vpop.permute.xlu0 %1728
    %1730 = vrot.lane.b32.xlu0 %v1201, 32
    %v1731 = vpop.permute.xlu0 %1730
    %1736 = vrot.lane.b32.xlu0 %v1091, 64
    %v1737 = vpop.permute.xlu0 %1736
    %1738 = vrot.lane.b32.xlu0 %v1203, 64
    %v1739 = vpop.permute.xlu0 %1738
    %1744 = vrot.lane.b32.xlu0 %v1093, 96
    %v1745 = vpop.permute.xlu0 %1744
    %1746 = vrot.lane.b32.xlu0 %v1205, 96
    %v1747 = vpop.permute.xlu0 %1746
    %1752 = vrot.lane.b32.xlu0 %v1305, 32
    %v1753 = vpop.permute.xlu0 %1752
    %1754 = vrot.lane.b32.xlu0 %v1417, 32
    %v1755 = vpop.permute.xlu0 %1754
    %1760 = vrot.lane.b32.xlu0 %v1307, 64
    %v1761 = vpop.permute.xlu0 %1760
    %1762 = vrot.lane.b32.xlu0 %v1419, 64
    %v1763 = vpop.permute.xlu0 %1762
    %1768 = vrot.lane.b32.xlu0 %v1309, 96
    %v1769 = vpop.permute.xlu0 %1768
    %1770 = vrot.lane.b32.xlu0 %v1421, 96
    %v1771 = vpop.permute.xlu0 %1770
    %1776 = vrot.lane.b32.xlu0 %v1313, 32
    %v1777 = vpop.permute.xlu0 %1776
    %1778 = vrot.lane.b32.xlu0 %v1425, 32
    %v1779 = vpop.permute.xlu0 %1778
    %1784 = vrot.lane.b32.xlu0 %v1315, 64
    %v1785 = vpop.permute.xlu0 %1784
    %1786 = vrot.lane.b32.xlu0 %v1427, 64
    %v1787 = vpop.permute.xlu0 %1786
    %1792 = vrot.lane.b32.xlu0 %v1317, 96
    %v1793 = vpop.permute.xlu0 %1792
    %1794 = vrot.lane.b32.xlu0 %v1429, 96
    %v1795 = vpop.permute.xlu0 %1794
    %1800 = vrot.lane.b32.xlu0 %v1529, 32
    %v1801 = vpop.permute.xlu0 %1800
    %1802 = vrot.lane.b32.xlu0 %v1641, 32
    %v1803 = vpop.permute.xlu0 %1802
    %1808 = vrot.lane.b32.xlu0 %v1531, 64
    %v1809 = vpop.permute.xlu0 %1808
    %1810 = vrot.lane.b32.xlu0 %v1643, 64
    %v1811 = vpop.permute.xlu0 %1810
    %1816 = vrot.lane.b32.xlu0 %v1533, 96
    %v1817 = vpop.permute.xlu0 %1816
    %1818 = vrot.lane.b32.xlu0 %v1645, 96
    %v1819 = vpop.permute.xlu0 %1818
    %1824 = vrot.lane.b32.xlu0 %v1537, 32
    %v1825 = vpop.permute.xlu0 %1824
    %1826 = vrot.lane.b32.xlu0 %v1649, 32
    %v1827 = vpop.permute.xlu0 %1826
    %1832 = vrot.lane.b32.xlu0 %v1539, 64
    %v1833 = vpop.permute.xlu0 %1832
    %1834 = vrot.lane.b32.xlu0 %v1651, 64
    %v1835 = vpop.permute.xlu0 %1834
    %1840 = vrot.lane.b32.xlu0 %v1541, 96
    %v1841 = vpop.permute.xlu0 %1840
    %1842 = vrot.lane.b32.xlu0 %v1653, 96
    %v1843 = vpop.permute.xlu0 %1842
    %vm1846 = vcmask 261120
    %v1847 = vsel %vm1846, %v855, %v1657
    %v1848 = vsel %vm1846, %v967, %v1659
    %vm1849 = vcmask 523264
    %v1850 = vsel %vm1849, %v1847, %v1665
    %v1851 = vsel %vm1849, %v1848, %v1667
    %vm1852 = vcmask 785408
    %v1853 = vsel %vm1852, %v1850, %v1673
    %v1854 = vsel %vm1852, %v1851, %v1675
    %v1855 = vsel %vm1846, %v863, %v1681
    %v1856 = vsel %vm1846, %v975, %v1683
    %v1857 = vsel %vm1849, %v1855, %v1689
    %v1858 = vsel %vm1849, %v1856, %v1691
    %v1859 = vsel %vm1852, %v1857, %v1697
    %v1860 = vsel %vm1852, %v1858, %v1699
    %v1861 = vsel %vm1846, %v1079, %v1705
    %v1862 = vsel %vm1846, %v1191, %v1707
    %v1863 = vsel %vm1849, %v1861, %v1713
    %v1864 = vsel %vm1849, %v1862, %v1715
    %v1865 = vsel %vm1852, %v1863, %v1721
    %v1866 = vsel %vm1852, %v1864, %v1723
    %v1867 = vsel %vm1846, %v1087, %v1729
    %v1868 = vsel %vm1846, %v1199, %v1731
    %v1869 = vsel %vm1849, %v1867, %v1737
    %v1870 = vsel %vm1849, %v1868, %v1739
    %v1871 = vsel %vm1852, %v1869, %v1745
    %v1872 = vsel %vm1852, %v1870, %v1747
    %v1873 = vsel %vm1846, %v1303, %v1753
    %v1874 = vsel %vm1846, %v1415, %v1755
    %v1875 = vsel %vm1849, %v1873, %v1761
    %v1876 = vsel %vm1849, %v1874, %v1763
    %v1877 = vsel %vm1852, %v1875, %v1769
    %v1878 = vsel %vm1852, %v1876, %v1771
    %v1879 = vsel %vm1846, %v1311, %v1777
    %v1880 = vsel %vm1846, %v1423, %v1779
    %v1881 = vsel %vm1849, %v1879, %v1785
    %v1882 = vsel %vm1849, %v1880, %v1787
    %v1883 = vsel %vm1852, %v1881, %v1793
    %v1884 = vsel %vm1852, %v1882, %v1795
    %v1885 = vsel %vm1846, %v1527, %v1801
    %v1886 = vsel %vm1846, %v1639, %v1803
    %v1887 = vsel %vm1849, %v1885, %v1809
    %v1888 = vsel %vm1849, %v1886, %v1811
    %v1889 = vsel %vm1852, %v1887, %v1817
    %v1890 = vsel %vm1852, %v1888, %v1819
    %v1891 = vsel %vm1846, %v1535, %v1825
    %v1892 = vsel %vm1846, %v1647, %v1827
    %v1893 = vsel %vm1849, %v1891, %v1833
    %v1894 = vsel %vm1849, %v1892, %v1835
    %v1895 = vsel %vm1852, %v1893, %v1841
    %v1896 = vsel %vm1852, %v1894, %v1843
    %v1897 = vld [vmem:[%s3] sm:$0xff]
    %v1899 = vsel %vm67, %v1897, 0
    %1901 = vmatpush.msra.mxu0 0.0
    %1902 = vmatpush.msra.mxu0 0.0
    %1903 = vmatpush.msra.mxu0 0.0
    %1904 = vmatpush.msra.mxu0 0.0
    %1905 = vmatpush.msra.mxu0 0.0
    %1906 = vmatpush.msra.mxu0 0.0
    %1907 = vmatpush.msra.mxu0 0.0
    %1908 = vmatpush.msra.mxu0 0.0
    %1909 = vmatpush.msra.mxu0 0.0
    %1910 = vmatpush.msra.mxu0 0.0
    %1911 = vmatpush.msra.mxu0 0.0
    %1912 = vmatpush.msra.mxu0 0.0
    %1913 = vmatpush.msra.mxu0 0.0
    %1914 = vmatpush.msra.mxu0 0.0
    %1915 = vmatpush.msra.mxu0 %v1854
    %1916 = vmatpush.msra.mxu0 %v1853
    %1917 = vmatmul.f32.gmra.mxu0 %v1899
    %v1918 = vpop.f32.mrf.mxu0
    %v1919 = vadd.f32 0.0, %v1918
    %1920 = vdwg.mxu0
    %1921 = vmatpush.msra.mxu0 0.0
    %1922 = vmatpush.msra.mxu0 0.0
    %1923 = vmatpush.msra.mxu0 0.0
    %1924 = vmatpush.msra.mxu0 0.0
    %1925 = vmatpush.msra.mxu0 0.0
    %1926 = vmatpush.msra.mxu0 0.0
    %1927 = vmatpush.msra.mxu0 0.0
    %1928 = vmatpush.msra.mxu0 0.0
    %1929 = vmatpush.msra.mxu0 0.0
    %1930 = vmatpush.msra.mxu0 0.0
    %1931 = vmatpush.msra.mxu0 0.0
    %1932 = vmatpush.msra.mxu0 0.0
    %1933 = vmatpush.msra.mxu0 0.0
    %1934 = vmatpush.msra.mxu0 0.0
    %1935 = vmatpush.msra.mxu0 %v1860
    %1936 = vmatpush.msra.mxu0 %v1859
    %1937 = vmatmul.f32.gmra.mxu0 %v1899
    %v1938 = vpop.f32.mrf.mxu0
    %v1939 = vadd.f32 0.0, %v1938
    %1940 = vdwg.mxu0
    %1941 = vmatpush.msra.mxu0 0.0
    %1942 = vmatpush.msra.mxu0 0.0
    %1943 = vmatpush.msra.mxu0 0.0
    %1944 = vmatpush.msra.mxu0 0.0
    %1945 = vmatpush.msra.mxu0 0.0
    %1946 = vmatpush.msra.mxu0 0.0
    %1947 = vmatpush.msra.mxu0 0.0
    %1948 = vmatpush.msra.mxu0 0.0
    %1949 = vmatpush.msra.mxu0 0.0
    %1950 = vmatpush.msra.mxu0 0.0
    %1951 = vmatpush.msra.mxu0 0.0
    %1952 = vmatpush.msra.mxu0 0.0
    %1953 = vmatpush.msra.mxu0 0.0
    %1954 = vmatpush.msra.mxu0 0.0
    %1955 = vmatpush.msra.mxu0 %v1866
    %1956 = vmatpush.msra.mxu0 %v1865
    %1957 = vmatmul.f32.gmra.mxu0 %v1899
    %v1958 = vpop.f32.mrf.mxu0
    %v1959 = vadd.f32 0.0, %v1958
    %1960 = vdwg.mxu0
    %1961 = vmatpush.msra.mxu0 0.0
    %1962 = vmatpush.msra.mxu0 0.0
    %1963 = vmatpush.msra.mxu0 0.0
    %1964 = vmatpush.msra.mxu0 0.0
    %1965 = vmatpush.msra.mxu0 0.0
    %1966 = vmatpush.msra.mxu0 0.0
    %1967 = vmatpush.msra.mxu0 0.0
    %1968 = vmatpush.msra.mxu0 0.0
    %1969 = vmatpush.msra.mxu0 0.0
    %1970 = vmatpush.msra.mxu0 0.0
    %1971 = vmatpush.msra.mxu0 0.0
    %1972 = vmatpush.msra.mxu0 0.0
    %1973 = vmatpush.msra.mxu0 0.0
    %1974 = vmatpush.msra.mxu0 0.0
    %1975 = vmatpush.msra.mxu0 %v1872
    %1976 = vmatpush.msra.mxu0 %v1871
    %1977 = vmatmul.f32.gmra.mxu0 %v1899
    %v1978 = vpop.f32.mrf.mxu0
    %v1979 = vadd.f32 0.0, %v1978
    %1980 = vdwg.mxu0
    %1981 = vmatpush.msra.mxu0 0.0
    %1982 = vmatpush.msra.mxu0 0.0
    %1983 = vmatpush.msra.mxu0 0.0
    %1984 = vmatpush.msra.mxu0 0.0
    %1985 = vmatpush.msra.mxu0 0.0
    %1986 = vmatpush.msra.mxu0 0.0
    %1987 = vmatpush.msra.mxu0 0.0
    %1988 = vmatpush.msra.mxu0 0.0
    %1989 = vmatpush.msra.mxu0 0.0
    %1990 = vmatpush.msra.mxu0 0.0
    %1991 = vmatpush.msra.mxu0 0.0
    %1992 = vmatpush.msra.mxu0 0.0
    %1993 = vmatpush.msra.mxu0 0.0
    %1994 = vmatpush.msra.mxu0 0.0
    %1995 = vmatpush.msra.mxu0 %v1878
    %1996 = vmatpush.msra.mxu0 %v1877
    %1997 = vmatmul.f32.gmra.mxu0 %v1899
    %v1998 = vpop.f32.mrf.mxu0
    %v1999 = vadd.f32 0.0, %v1998
    %2000 = vdwg.mxu0
    %2001 = vmatpush.msra.mxu0 0.0
    %2002 = vmatpush.msra.mxu0 0.0
    %2003 = vmatpush.msra.mxu0 0.0
    %2004 = vmatpush.msra.mxu0 0.0
    %2005 = vmatpush.msra.mxu0 0.0
    %2006 = vmatpush.msra.mxu0 0.0
    %2007 = vmatpush.msra.mxu0 0.0
    %2008 = vmatpush.msra.mxu0 0.0
    %2009 = vmatpush.msra.mxu0 0.0
    %2010 = vmatpush.msra.mxu0 0.0
    %2011 = vmatpush.msra.mxu0 0.0
    %2012 = vmatpush.msra.mxu0 0.0
    %2013 = vmatpush.msra.mxu0 0.0
    %2014 = vmatpush.msra.mxu0 0.0
    %2015 = vmatpush.msra.mxu0 %v1884
    %2016 = vmatpush.msra.mxu0 %v1883
    %2017 = vmatmul.f32.gmra.mxu0 %v1899
    %v2018 = vpop.f32.mrf.mxu0
    %v2019 = vadd.f32 0.0, %v2018
    %2020 = vdwg.mxu0
    %2021 = vmatpush.msra.mxu0 0.0
    %2022 = vmatpush.msra.mxu0 0.0
    %2023 = vmatpush.msra.mxu0 0.0
    %2024 = vmatpush.msra.mxu0 0.0
    %2025 = vmatpush.msra.mxu0 0.0
    %2026 = vmatpush.msra.mxu0 0.0
    %2027 = vmatpush.msra.mxu0 0.0
    %2028 = vmatpush.msra.mxu0 0.0
    %2029 = vmatpush.msra.mxu0 0.0
    %2030 = vmatpush.msra.mxu0 0.0
    %2031 = vmatpush.msra.mxu0 0.0
    %2032 = vmatpush.msra.mxu0 0.0
    %2033 = vmatpush.msra.mxu0 0.0
    %2034 = vmatpush.msra.mxu0 0.0
    %2035 = vmatpush.msra.mxu0 %v1890
    %2036 = vmatpush.msra.mxu0 %v1889
    %2037 = vmatmul.f32.gmra.mxu0 %v1899
    %v2038 = vpop.f32.mrf.mxu0
    %v2039 = vadd.f32 0.0, %v2038
    %2040 = vdwg.mxu0
    %2041 = vmatpush.msra.mxu0 0.0
    %2042 = vmatpush.msra.mxu0 0.0
    %2043 = vmatpush.msra.mxu0 0.0
    %2044 = vmatpush.msra.mxu0 0.0
    %2045 = vmatpush.msra.mxu0 0.0
    %2046 = vmatpush.msra.mxu0 0.0
    %2047 = vmatpush.msra.mxu0 0.0
    %2048 = vmatpush.msra.mxu0 0.0
    %2049 = vmatpush.msra.mxu0 0.0
    %2050 = vmatpush.msra.mxu0 0.0
    %2051 = vmatpush.msra.mxu0 0.0
    %2052 = vmatpush.msra.mxu0 0.0
    %2053 = vmatpush.msra.mxu0 0.0
    %2054 = vmatpush.msra.mxu0 0.0
    %2055 = vmatpush.msra.mxu0 %v1896
    %2056 = vmatpush.msra.mxu0 %v1895
    %2057 = vmatmul.f32.gmra.mxu0 %v1899
    %v2058 = vpop.f32.mrf.mxu0
    %v2059 = vadd.f32 0.0, %v2058
    %2060 = vdwg.mxu0
    %2061 = vst [vmem:[%s4] sm:$0xff] %v1919
    %2062 = vst [vmem:[%s4 + $0x8] sm:$0xff] %v1939
    %2063 = vst [vmem:[%s4 + $0x10] sm:$0xff] %v1959
    %2064 = vst [vmem:[%s4 + $0x18] sm:$0xff] %v1979
    %2065 = vst [vmem:[%s4 + $0x20] sm:$0xff] %v1999
    %2066 = vst [vmem:[%s4 + $0x28] sm:$0xff] %v2019
    %2067 = vst [vmem:[%s4 + $0x30] sm:$0xff] %v2039
    %2068 = vst [vmem:[%s4 + $0x38] sm:$0xff] %v2059
    // Predicated region
    $region22: #{upsample_pallas.1} parent=1 // pred_check
      _
    $region23: #{upsample_pallas.1} parent=1 // pred_check_branch
      %2070 = sbr.rel (0) target = $region25
    $region24: #{upsample_pallas.1} parent=1 // pred_region
      _
    $region25: #{upsample_pallas.1} parent=1 // pred_fallthru
      _
    // Predicated region
    $region26: #{upsample_pallas.1} parent=1 // pred_check
      _
    $region27: #{upsample_pallas.1} parent=1 // pred_check_branch
      %2072 = sbr.rel (0) target = $region29
    $region28: #{upsample_pallas.1} parent=1 // pred_region
      _
    $region29: #{upsample_pallas.1} parent=1 // pred_fallthru
      _
    %2073 = vsyncpa [#allocation3], 1

</llo_original>
